<compile_context>
chip_gen: v6e
topology: v6e:2x2x1
jax: 0.10.0
libtpu: 0.0.40
codegen_flags: <defaults>
</compile_context>

<pallas_src>
import functools
import math

import jax
import jax.numpy as jnp
import numpy as np
from jax.experimental import pallas as pl
from jax.experimental.pallas import tpu as pltpu


def snr_to_noise(snr_db):
    """SNR_to_noise from the PyTorch model (runtime jnp scalar)."""
    snr = jnp.asarray(snr_db, jnp.float32)
    return 1.0 / jnp.sqrt(2.0 * 10.0 ** (snr / 10.0))


def _conv_tap_masks(h, w, dtype):
    """(9, 1, h*w) {0,1} masks implementing the zero padding of a SAME 3x3 conv."""
    ii, jj = np.meshgrid(np.arange(h), np.arange(w), indexing="ij")
    masks = []
    for ky in range(3):
        for kx in range(3):
            dy, dx = ky - 1, kx - 1
            valid = ((ii + dy >= 0) & (ii + dy < h) &
                     (jj + dx >= 0) & (jj + dx < w))
            masks.append(valid.reshape(1, h * w))
    return jnp.asarray(np.stack(masks, axis=0), dtype=dtype)          # (9, 1, hw)


def _deconv2_kernel(x_ref, wfull_ref, mask_ref, bconv_ref, alpha_ref,
                    w1f_ref, b1_ref, w2_ref, b2_ref, o_ref, stacked_ref, *, w):
    bt, c_in, hw = x_ref.shape
    inv_hw = 1.0 / float(hw)

    # Small per-call constants, hoisted out of the batch loop (broadcasts are
    # not CSE'd by JAX, so materialize them once).
    w_full = wfull_ref[...]                            # (c_out, 9*c_in), MXU dtype
    bconv = bconv_ref[...]                             # (c_out, 1) f32
    alpha = alpha_ref[...]                             # (c_out, 1) f32
    w1f = w1f_ref[...]                                 # (c_out, hid) f32
    b1 = b1_ref[...]                                   # (1, hid) f32 (noise folded in)
    w2 = w2_ref[...]                                   # (c_out, hid) f32
    b2 = b2_ref[...]                                   # (c_out, 1) f32

    def body(bi, carry):
        x = x_ref[bi]                                  # (c_in, hw), input dtype

        # ---- stack the 9 shifted+masked taps into (9*c_in, hw) scratch -------
        for t in range(9):
            ky, kx = t // 3, t % 3
            s = (ky - 1) * w + (kx - 1)                # flat spatial shift
            shifted = x if s == 0 else pltpu.roll(x, (-s) % hw, 1)
            # Mask in the input dtype (f32) before the downcast; center tap
            # (t == 4) has an all-ones mask -> skip the multiply.
            tap = shifted if t == 4 else shifted * mask_ref[t]
            stacked_ref[pl.ds(t * c_in, c_in), :] = tap.astype(stacked_ref.dtype)

        # ---- 3x3 SAME conv as ONE MXU matmul (K = 9*c_in), f32 accumulation --
        acc = jnp.dot(w_full, stacked_ref[...],
                      preferred_element_type=jnp.float32) + bconv

        # ---- PReLU (per-channel slope) ---------------------------------------
        act = jnp.where(acc > 0, acc, alpha * acc)     # (c_out, hw), f32

        # ---- AF module: squeeze (f32 global average pool) ----------------------
        pooled = jnp.sum(act, axis=1, keepdims=True) * inv_hw        # (c_out, 1)

        # ---- Excitation (tiny; VPU + XLU, off the MXU result path) -------------
        h1 = jnp.sum(w1f * pooled, axis=0, keepdims=True) + b1       # (1, hid)
        h1 = jnp.maximum(h1, 0.0)
        g = jnp.sum(w2 * h1, axis=1, keepdims=True) + b2             # (c_out, 1)
        gate = 1.0 / (1.0 + jnp.exp(-g))                             # sigmoid (EUP)

        # ---- Scale in f32, cast exactly once at the store -----------------------
        o_ref[bi] = (act * gate).astype(o_ref.dtype)
        return carry

    jax.lax.fori_loop(0, bt, body, 0)


def _tpu_limits():
    """(VMEM capacity bytes, #TensorCores) with safe fallbacks (v7x-conservative)."""
    vmem = 64 * 1024 * 1024
    cores = 1
    try:
        info = pltpu.get_tpu_info()
        vmem = int(getattr(info, "vmem_capacity_bytes", vmem))
        for attr in ("num_cores", "num_tensorcores", "tensor_cores_per_chip",
                     "core_count"):
            v = getattr(info, attr, None)
            if v:
                cores = int(v)
                break
    except Exception:
        pass
    return vmem, max(1, cores)


def _pick_batch_tile(b, per_batch_bytes, fixed_bytes, budget_bytes, num_cores):
    """Biggest batch tile that fits the VMEM budget; keep >= 2 grid steps per
    TensorCore only on multi-TC chips (v7x); exact tiling (no padded tail)."""
    usable = max(budget_bytes - fixed_bytes, per_batch_bytes)
    bt = max(1, int(usable // max(1, per_batch_bytes)))
    if num_cores > 1 and b >= 2 * num_cores:
        bt = min(bt, max(1, b // (2 * num_cores)))
    bt = max(1, min(bt, b))
    while b % bt:
        bt -= 1
    return bt


def deconv2_forward(x, params, snr_db, *, conv_mxu_dtype=jnp.bfloat16):
    """x: (b, c_in, h, w) NCHW. params: deconv2 weights. snr_db: SNR in dB (n_var)."""
    wc, bc = params["conv_w"], params["conv_b"]            # (c_out,c_in,3,3), (c_out,)
    alpha = params["prelu_a"]                              # (c_out,)
    w1, b1 = params["se_w1"], params["se_b1"]              # (hid, c_out+1), (hid,)
    w2, b2 = params["se_w2"], params["se_b2"]              # (c_out, hid),   (c_out,)

    b, c_in, h, w = x.shape
    c_out = wc.shape[0]
    hid = w1.shape[0]
    hw = h * w
    dt = x.dtype

    # NCHW kept end-to-end; only a free reshape so h*w lands on the lane axis.
    x_r = x.reshape(b, c_in, hw)

    # Tap-major fused weight: column (t*c_in + ci) multiplies tap t, channel ci.
    w_full = (jnp.transpose(wc, (0, 2, 3, 1))
              .reshape(c_out, 9 * c_in).astype(conv_mxu_dtype))
    tap_mask = _conv_tap_masks(h, w, dt)                               # (9, 1, hw)
    bconv = bc.reshape(c_out, 1).astype(jnp.float32)
    alpha_c = alpha.reshape(c_out, 1).astype(jnp.float32)
    # Fold the (runtime) noise std into the SE bias: b1_eff = b1 + W1[:, 0]*noise.
    noise = snr_to_noise(snr_db)
    b1_eff = (b1.astype(jnp.float32) +
              w1[:, 0].astype(jnp.float32) * noise).reshape(1, hid)
    w1_featT = jnp.transpose(w1[:, 1:], (1, 0)).astype(jnp.float32)    # (c_out, hid)
    w2_r = w2.reshape(c_out, hid).astype(jnp.float32)
    b2_c = b2.reshape(c_out, 1).astype(jnp.float32)

    in_item = x.dtype.itemsize
    mxu_item = jnp.dtype(conv_mxu_dtype).itemsize
    vmem_cap, num_cores = _tpu_limits()
    vmem_limit = max(32 * 1024 * 1024,
                     min(int(0.70 * vmem_cap), 112 * 1024 * 1024))
    # Fixed (bt-independent) VMEM: stacked-tap scratch, double-buffered weights
    # and masks, and one f32 acc/act working tile (fori_loop keeps only one live).
    fixed_bytes = (9 * c_in * hw * mxu_item
                   + 2 * (9 * c_out * c_in * mxu_item + 9 * hw * in_item)
                   + 3 * c_out * hw * 4
                   + (1 << 20))
    per_batch_bytes = 2 * (c_in * hw * in_item + c_out * hw * in_item)  # dbl-buffered x/out
    bt = _pick_batch_tile(b, per_batch_bytes, fixed_bytes,
                          budget_bytes=vmem_limit, num_cores=num_cores)
    grid = (b // bt,)
    # TODO(synk): for large h*w (e.g. 56x56 maps) add a two-pass variant (pass 1:
    # conv+PReLU+partial pooled sums over 128-lane-multiple hw tiles, pass 2:
    # gate+scale) so blocks stay inside v7x's 64 MiB VMEM.

    cost = pl.CostEstimate(
        flops=int(2 * b * hw * c_out * 9 * c_in + 10 * b * hw * c_out),
        transcendentals=int(b * (c_out + hid)),
        bytes_accessed=int((x_r.size + b * c_out * hw) * in_item
                           + w_full.size * mxu_item),
    )

    def wspec2(shape):
        return pl.BlockSpec(shape, lambda i: (0, 0))

    out = pl.pallas_call(
        functools.partial(_deconv2_kernel, w=w),
        out_shape=jax.ShapeDtypeStruct((b, c_out, hw), dt),
        grid_spec=pltpu.PrefetchScalarGridSpec(
            num_scalar_prefetch=0,
            grid=grid,
            in_specs=[
                pl.BlockSpec((bt, c_in, hw), lambda i: (i, 0, 0)),     # x
                wspec2((c_out, 9 * c_in)),                             # fused conv weight
                pl.BlockSpec((9, 1, hw), lambda i: (0, 0, 0)),         # tap masks
                wspec2((c_out, 1)),                                    # conv bias
                wspec2((c_out, 1)),                                    # prelu alpha
                wspec2((c_out, hid)),                                  # W1 feature part (T)
                wspec2((1, hid)),                                      # b1 (+ noise term)
                wspec2((c_out, hid)),                                  # W2
                wspec2((c_out, 1)),                                    # b2
            ],
            out_specs=pl.BlockSpec((bt, c_out, hw), lambda i: (i, 0, 0)),
            scratch_shapes=[pltpu.VMEM((9 * c_in, hw), conv_mxu_dtype)],
        ),
        compiler_params=pltpu.CompilerParams(
            dimension_semantics=("parallel",),
            vmem_limit_bytes=vmem_limit,
        ),
        cost_estimate=cost,
    )(x_r, w_full, tap_mask, bconv, alpha_c, w1_featT, b1_eff, w2_r, b2_c)

    return out.reshape(b, c_out, h, w)


def deconv2_ref(x, params, snr_db):
    """Pure-JAX reference mirroring the PyTorch module (deconv2.forward)."""
    wc, bc = params["conv_w"], params["conv_b"]
    alpha = params["prelu_a"]
    w1, b1 = params["se_w1"], params["se_b1"]
    w2, b2 = params["se_w2"], params["se_b2"]

    y = jax.lax.conv_general_dilated(
        x, wc, window_strides=(1, 1), padding="SAME",
        dimension_numbers=("NCHW", "OIHW", "NCHW"),
        precision=jax.lax.Precision.HIGHEST)
    y = y + bc[None, :, None, None]
    y = jnp.where(y > 0, y, alpha[None, :, None, None] * y)          # PReLU

    noise = snr_to_noise(snr_db)
    pooled = jnp.mean(y, axis=(2, 3))                                 # (b, c_out)
    v = jnp.concatenate(
        [jnp.full((x.shape[0], 1), noise, pooled.dtype), pooled], axis=1)
    h1 = jnp.maximum(v @ w1.T + b1[None, :], 0.0)
    g = jax.nn.sigmoid(h1 @ w2.T + b2[None, :])
    return y * g[:, :, None, None]


if __name__ == "__main__":
    key = jax.random.PRNGKey(0)
    b, c_in, c_out, h, w = 2, 32, 64, 16, 16      # h*w = 256 -> lane-dense blocks
    hid = c_out // 8
    snr_db = 10.0                                  # n_var (SNR in dB)

    kx, kw, kb, ka, k1, kb1, k2, kb2 = jax.random.split(key, 8)
    x = jax.random.normal(kx, (b, c_in, h, w), jnp.float32)

    kconv = 1.0 / math.sqrt(c_in * 9)
    k1b = 1.0 / math.sqrt(c_out + 1)
    k2b = 1.0 / math.sqrt(hid)
    params = {
        "conv_w": jax.random.uniform(kw, (c_out, c_in, 3, 3), jnp.float32, -kconv, kconv),
        "conv_b": jax.random.uniform(kb, (c_out,), jnp.float32, -kconv, kconv),
        "prelu_a": jax.random.uniform(ka, (c_out,), jnp.float32, 0.1, 0.4),
        "se_w1": jax.random.uniform(k1, (hid, c_out + 1), jnp.float32, -k1b, k1b),
        "se_b1": jax.random.uniform(kb1, (hid,), jnp.float32, -k1b, k1b),
        "se_w2": jax.random.uniform(k2, (c_out, hid), jnp.float32, -k2b, k2b),
        "se_b2": jax.random.uniform(kb2, (c_out,), jnp.float32, -k2b, k2b),
    }

    ref = deconv2_ref(x, params, snr_db)

    # f32-MXU path: must match the XLA reference tightly (guards tap/mask indexing).
    out_f32 = jax.block_until_ready(
        deconv2_forward(x, params, snr_db, conv_mxu_dtype=jnp.float32))
    assert out_f32.shape == (b, c_out, h, w)
    assert jnp.allclose(out_f32, ref, atol=3e-5, rtol=3e-5), (
        f"f32 path mismatch vs reference: max |diff| = "
        f"{jnp.max(jnp.abs(out_f32 - ref))}")

    # Default bf16-MXU path (perf config): bf16 operands, f32 accumulation.
    out_bf16 = jax.block_until_ready(deconv2_forward(x, params, snr_db))
    assert jnp.allclose(out_bf16, ref, atol=3e-2, rtol=3e-2), (
        f"bf16 path mismatch vs reference: max |diff| = "
        f"{jnp.max(jnp.abs(out_bf16 - ref))}")

    print("KERNEL_OK")
</pallas_src>

<mosaic_0001>
module attributes {stable_mosaic.version = 11 : i64} {
  func.func @_deconv2_kernel(%arg0: i32, %arg1: memref<2x32x256xf32, #tpu.memory_space<vmem>>, %arg2: memref<64x288xf32, #tpu.memory_space<vmem>>, %arg3: memref<9x1x256xf32, #tpu.memory_space<vmem>>, %arg4: memref<64x1xf32, #tpu.memory_space<vmem>>, %arg5: memref<64x1xf32, #tpu.memory_space<vmem>>, %arg6: memref<64x8xf32, #tpu.memory_space<vmem>>, %arg7: memref<1x8xf32, #tpu.memory_space<vmem>>, %arg8: memref<64x8xf32, #tpu.memory_space<vmem>>, %arg9: memref<64x1xf32, #tpu.memory_space<vmem>>, %arg10: memref<2x64x256xf32, #tpu.memory_space<vmem>>, %arg11: memref<288x256xf32, #tpu.memory_space<vmem>>) attributes {dimension_semantics = [#tpu.dimension_semantics<parallel>], iteration_bounds = array<i64: 1>, scalar_prefetch = 0 : i64, scratch_operands = 1 : i64, tpu.core_type = #tpu.core_type<tc>, window_params = [{transform_indices = @transform_0, window_bounds = array<i64: 2, 32, 256>}, {pipeline_mode = #tpu.pipeline_mode<synchronous>, transform_indices = @transform_1, window_bounds = array<i64: 64, 288>}, {pipeline_mode = #tpu.pipeline_mode<synchronous>, transform_indices = @transform_2, window_bounds = array<i64: 9, 1, 256>}, {pipeline_mode = #tpu.pipeline_mode<synchronous>, transform_indices = @transform_3, window_bounds = array<i64: 64, 1>}, {pipeline_mode = #tpu.pipeline_mode<synchronous>, transform_indices = @transform_4, window_bounds = array<i64: 64, 1>}, {pipeline_mode = #tpu.pipeline_mode<synchronous>, transform_indices = @transform_5, window_bounds = array<i64: 64, 8>}, {pipeline_mode = #tpu.pipeline_mode<synchronous>, transform_indices = @transform_6, window_bounds = array<i64: 1, 8>}, {pipeline_mode = #tpu.pipeline_mode<synchronous>, transform_indices = @transform_7, window_bounds = array<i64: 64, 8>}, {pipeline_mode = #tpu.pipeline_mode<synchronous>, transform_indices = @transform_8, window_bounds = array<i64: 64, 1>}, {transform_indices = @transform_9, window_bounds = array<i64: 2, 64, 256>}]} {
    %c0 = arith.constant 0 : index
    %c0_0 = arith.constant 0 : index
    %0 = vector.load %arg2[%c0, %c0_0] : memref<64x288xf32, #tpu.memory_space<vmem>>, vector<64x288xf32>
    %c0_1 = arith.constant 0 : index
    %c0_2 = arith.constant 0 : index
    %1 = vector.load %arg4[%c0_1, %c0_2] : memref<64x1xf32, #tpu.memory_space<vmem>>, vector<64x1xf32>
    %c0_3 = arith.constant 0 : index
    %c0_4 = arith.constant 0 : index
    %2 = vector.load %arg5[%c0_3, %c0_4] : memref<64x1xf32, #tpu.memory_space<vmem>>, vector<64x1xf32>
    %c0_5 = arith.constant 0 : index
    %c0_6 = arith.constant 0 : index
    %3 = vector.load %arg6[%c0_5, %c0_6] : memref<64x8xf32, #tpu.memory_space<vmem>>, vector<64x8xf32>
    %c0_7 = arith.constant 0 : index
    %c0_8 = arith.constant 0 : index
    %4 = vector.load %arg7[%c0_7, %c0_8] : memref<1x8xf32, #tpu.memory_space<vmem>>, vector<1x8xf32>
    %c0_9 = arith.constant 0 : index
    %c0_10 = arith.constant 0 : index
    %5 = vector.load %arg8[%c0_9, %c0_10] : memref<64x8xf32, #tpu.memory_space<vmem>>, vector<64x8xf32>
    %c0_11 = arith.constant 0 : index
    %c0_12 = arith.constant 0 : index
    %6 = vector.load %arg9[%c0_11, %c0_12] : memref<64x1xf32, #tpu.memory_space<vmem>>, vector<64x1xf32>
    %c0_i32 = arith.constant 0 : i32
    %c2_i32 = arith.constant 2 : i32
    %7 = arith.addi %c0_i32, %c2_i32 : i32
    %c1_i32 = arith.constant 1 : i32
    scf.for %arg12 = %c0_i32 to %7 step %c1_i32  : i32 {
      %8 = arith.index_cast %arg12 : i32 to index
      %c0_14 = arith.constant 0 : index
      %c0_15 = arith.constant 0 : index
      %9 = vector.load %arg1[%8, %c0_14, %c0_15] : memref<2x32x256xf32, #tpu.memory_space<vmem>>, vector<1x32x256xf32>
      %10 = vector.shape_cast %9 : vector<1x32x256xf32> to vector<32x256xf32>
      %c17_i32 = arith.constant 17 : i32
      %11 = tpu.dynamic_rotate %10 by %c17_i32 dim 1 : vector<32x256xf32>, i32 -> vector<32x256xf32>
      %c0_16 = arith.constant 0 : index
      %c0_17 = arith.constant 0 : index
      %c0_18 = arith.constant 0 : index
      %12 = vector.load %arg3[%c0_16, %c0_17, %c0_18] : memref<9x1x256xf32, #tpu.memory_space<vmem>>, vector<1x1x256xf32>
      %13 = vector.shape_cast %12 : vector<1x1x256xf32> to vector<1x256xf32>
      %14 = vector.broadcast %13 : vector<1x256xf32> to vector<32x256xf32>
      %15 = arith.mulf %11, %14 : vector<32x256xf32>
      %c0_19 = arith.constant 0 : index
      %c0_20 = arith.constant 0 : index
      %16 = vector.load %arg11[%c0_19, %c0_20] : memref<288x256xf32, #tpu.memory_space<vmem>>, vector<32x256xf32>
      tpu.vector_store %arg11[%c0_19, %c0_20], %15 {strides = array<i32>} : memref<288x256xf32, #tpu.memory_space<vmem>>, vector<32x256xf32>,
      %c16_i32 = arith.constant 16 : i32
      %17 = tpu.dynamic_rotate %10 by %c16_i32 dim 1 : vector<32x256xf32>, i32 -> vector<32x256xf32>
      %c1 = arith.constant 1 : index
      %c0_21 = arith.constant 0 : index
      %c0_22 = arith.constant 0 : index
      %18 = vector.load %arg3[%c1, %c0_21, %c0_22] : memref<9x1x256xf32, #tpu.memory_space<vmem>>, vector<1x1x256xf32>
      %19 = vector.shape_cast %18 : vector<1x1x256xf32> to vector<1x256xf32>
      %20 = vector.broadcast %19 : vector<1x256xf32> to vector<32x256xf32>
      %21 = arith.mulf %17, %20 : vector<32x256xf32>
      %c32 = arith.constant 32 : index
      %c0_23 = arith.constant 0 : index
      %22 = vector.load %arg11[%c32, %c0_23] : memref<288x256xf32, #tpu.memory_space<vmem>>, vector<32x256xf32>
      tpu.vector_store %arg11[%c32, %c0_23], %21 {strides = array<i32>} : memref<288x256xf32, #tpu.memory_space<vmem>>, vector<32x256xf32>,
      %c15_i32 = arith.constant 15 : i32
      %23 = tpu.dynamic_rotate %10 by %c15_i32 dim 1 : vector<32x256xf32>, i32 -> vector<32x256xf32>
      %c2 = arith.constant 2 : index
      %c0_24 = arith.constant 0 : index
      %c0_25 = arith.constant 0 : index
      %24 = vector.load %arg3[%c2, %c0_24, %c0_25] : memref<9x1x256xf32, #tpu.memory_space<vmem>>, vector<1x1x256xf32>
      %25 = vector.shape_cast %24 : vector<1x1x256xf32> to vector<1x256xf32>
      %26 = vector.broadcast %25 : vector<1x256xf32> to vector<32x256xf32>
      %27 = arith.mulf %23, %26 : vector<32x256xf32>
      %c64 = arith.constant 64 : index
      %c0_26 = arith.constant 0 : index
      %28 = vector.load %arg11[%c64, %c0_26] : memref<288x256xf32, #tpu.memory_space<vmem>>, vector<32x256xf32>
      tpu.vector_store %arg11[%c64, %c0_26], %27 {strides = array<i32>} : memref<288x256xf32, #tpu.memory_space<vmem>>, vector<32x256xf32>,
      %c1_i32_27 = arith.constant 1 : i32
      %29 = tpu.dynamic_rotate %10 by %c1_i32_27 dim 1 : vector<32x256xf32>, i32 -> vector<32x256xf32>
      %c3 = arith.constant 3 : index
      %c0_28 = arith.constant 0 : index
      %c0_29 = arith.constant 0 : index
      %30 = vector.load %arg3[%c3, %c0_28, %c0_29] : memref<9x1x256xf32, #tpu.memory_space<vmem>>, vector<1x1x256xf32>
      %31 = vector.shape_cast %30 : vector<1x1x256xf32> to vector<1x256xf32>
      %32 = vector.broadcast %31 : vector<1x256xf32> to vector<32x256xf32>
      %33 = arith.mulf %29, %32 : vector<32x256xf32>
      %c96 = arith.constant 96 : index
      %c0_30 = arith.constant 0 : index
      %34 = vector.load %arg11[%c96, %c0_30] : memref<288x256xf32, #tpu.memory_space<vmem>>, vector<32x256xf32>
      tpu.vector_store %arg11[%c96, %c0_30], %33 {strides = array<i32>} : memref<288x256xf32, #tpu.memory_space<vmem>>, vector<32x256xf32>,
      %c128 = arith.constant 128 : index
      %c0_31 = arith.constant 0 : index
      %35 = vector.load %arg11[%c128, %c0_31] : memref<288x256xf32, #tpu.memory_space<vmem>>, vector<32x256xf32>
      tpu.vector_store %arg11[%c128, %c0_31], %10 {strides = array<i32>} : memref<288x256xf32, #tpu.memory_space<vmem>>, vector<32x256xf32>,
      %c255_i32 = arith.constant 255 : i32
      %36 = tpu.dynamic_rotate %10 by %c255_i32 dim 1 : vector<32x256xf32>, i32 -> vector<32x256xf32>
      %c5 = arith.constant 5 : index
      %c0_32 = arith.constant 0 : index
      %c0_33 = arith.constant 0 : index
      %37 = vector.load %arg3[%c5, %c0_32, %c0_33] : memref<9x1x256xf32, #tpu.memory_space<vmem>>, vector<1x1x256xf32>
      %38 = vector.shape_cast %37 : vector<1x1x256xf32> to vector<1x256xf32>
      %39 = vector.broadcast %38 : vector<1x256xf32> to vector<32x256xf32>
      %40 = arith.mulf %36, %39 : vector<32x256xf32>
      %c160 = arith.constant 160 : index
      %c0_34 = arith.constant 0 : index
      %41 = vector.load %arg11[%c160, %c0_34] : memref<288x256xf32, #tpu.memory_space<vmem>>, vector<32x256xf32>
      tpu.vector_store %arg11[%c160, %c0_34], %40 {strides = array<i32>} : memref<288x256xf32, #tpu.memory_space<vmem>>, vector<32x256xf32>,
      %c241_i32 = arith.constant 241 : i32
      %42 = tpu.dynamic_rotate %10 by %c241_i32 dim 1 : vector<32x256xf32>, i32 -> vector<32x256xf32>
      %c6 = arith.constant 6 : index
      %c0_35 = arith.constant 0 : index
      %c0_36 = arith.constant 0 : index
      %43 = vector.load %arg3[%c6, %c0_35, %c0_36] : memref<9x1x256xf32, #tpu.memory_space<vmem>>, vector<1x1x256xf32>
      %44 = vector.shape_cast %43 : vector<1x1x256xf32> to vector<1x256xf32>
      %45 = vector.broadcast %44 : vector<1x256xf32> to vector<32x256xf32>
      %46 = arith.mulf %42, %45 : vector<32x256xf32>
      %c192 = arith.constant 192 : index
      %c0_37 = arith.constant 0 : index
      %47 = vector.load %arg11[%c192, %c0_37] : memref<288x256xf32, #tpu.memory_space<vmem>>, vector<32x256xf32>
      tpu.vector_store %arg11[%c192, %c0_37], %46 {strides = array<i32>} : memref<288x256xf32, #tpu.memory_space<vmem>>, vector<32x256xf32>,
      %c240_i32 = arith.constant 240 : i32
      %48 = tpu.dynamic_rotate %10 by %c240_i32 dim 1 : vector<32x256xf32>, i32 -> vector<32x256xf32>
      %c7 = arith.constant 7 : index
      %c0_38 = arith.constant 0 : index
      %c0_39 = arith.constant 0 : index
      %49 = vector.load %arg3[%c7, %c0_38, %c0_39] : memref<9x1x256xf32, #tpu.memory_space<vmem>>, vector<1x1x256xf32>
      %50 = vector.shape_cast %49 : vector<1x1x256xf32> to vector<1x256xf32>
      %51 = vector.broadcast %50 : vector<1x256xf32> to vector<32x256xf32>
      %52 = arith.mulf %48, %51 : vector<32x256xf32>
      %c224 = arith.constant 224 : index
      %c0_40 = arith.constant 0 : index
      %53 = vector.load %arg11[%c224, %c0_40] : memref<288x256xf32, #tpu.memory_space<vmem>>, vector<32x256xf32>
      tpu.vector_store %arg11[%c224, %c0_40], %52 {strides = array<i32>} : memref<288x256xf32, #tpu.memory_space<vmem>>, vector<32x256xf32>,
      %c239_i32 = arith.constant 239 : i32
      %54 = tpu.dynamic_rotate %10 by %c239_i32 dim 1 : vector<32x256xf32>, i32 -> vector<32x256xf32>
      %c8 = arith.constant 8 : index
      %c0_41 = arith.constant 0 : index
      %c0_42 = arith.constant 0 : index
      %55 = vector.load %arg3[%c8, %c0_41, %c0_42] : memref<9x1x256xf32, #tpu.memory_space<vmem>>, vector<1x1x256xf32>
      %56 = vector.shape_cast %55 : vector<1x1x256xf32> to vector<1x256xf32>
      %57 = vector.broadcast %56 : vector<1x256xf32> to vector<32x256xf32>
      %58 = arith.mulf %54, %57 : vector<32x256xf32>
      %c256 = arith.constant 256 : index
      %c0_43 = arith.constant 0 : index
      %59 = vector.load %arg11[%c256, %c0_43] : memref<288x256xf32, #tpu.memory_space<vmem>>, vector<32x256xf32>
      tpu.vector_store %arg11[%c256, %c0_43], %58 {strides = array<i32>} : memref<288x256xf32, #tpu.memory_space<vmem>>, vector<32x256xf32>,
      %c0_44 = arith.constant 0 : index
      %c0_45 = arith.constant 0 : index
      %60 = vector.load %arg11[%c0_44, %c0_45] : memref<288x256xf32, #tpu.memory_space<vmem>>, vector<288x256xf32>
      %cst = arith.constant dense<0.000000e+00> : vector<64x256xf32>
      %61 = tpu.matmul %0, %60, %cst {dimension_numbers = #tpu.dot_dimension_numbers<[1], [0], [0], [1], [0, 0, 1, 1], [], []>} : vector<64x288xf32>, vector<288x256xf32>, vector<64x256xf32> -> vector<64x256xf32>
      %62 = vector.broadcast %1 : vector<64x1xf32> to vector<64x256xf32>
      %63 = arith.addf %61, %62 : vector<64x256xf32>
      %cst_46 = arith.constant 0.000000e+00 : f32
      %64 = vector.broadcast %cst_46 : f32 to vector<64x256xf32>
      %65 = arith.cmpf ogt, %63, %64 : vector<64x256xf32>
      %66 = vector.broadcast %2 : vector<64x1xf32> to vector<64x256xf32>
      %67 = arith.mulf %66, %63 : vector<64x256xf32>
      %68 = arith.select %65, %63, %67 : vector<64x256xi1>, vector<64x256xf32>
      %cst_47 = arith.constant dense<0.000000e+00> : vector<64xf32>
      %69 = vector.multi_reduction <add>, %68, %cst_47 [1] : vector<64x256xf32> to vector<64xf32>
      %70 = vector.shape_cast %69 : vector<64xf32> to vector<64x1xf32>
      %cst_48 = arith.constant 3.906250e-03 : f32
      %71 = vector.broadcast %cst_48 : f32 to vector<64x1xf32>
      %72 = arith.mulf %70, %71 : vector<64x1xf32>
      %73 = vector.broadcast %72 : vector<64x1xf32> to vector<64x8xf32>
      %74 = arith.mulf %3, %73 : vector<64x8xf32>
      %cst_49 = arith.constant dense<0.000000e+00> : vector<8xf32>
      %75 = vector.multi_reduction <add>, %74, %cst_49 [0] : vector<64x8xf32> to vector<8xf32>
      %76 = vector.shape_cast %75 : vector<8xf32> to vector<1x8xf32>
      %77 = arith.addf %76, %4 : vector<1x8xf32>
      %cst_50 = arith.constant 0.000000e+00 : f32
      %78 = vector.broadcast %cst_50 : f32 to vector<1x8xf32>
      %79 = arith.maximumf %77, %78 : vector<1x8xf32>
      %80 = vector.broadcast %79 : vector<1x8xf32> to vector<64x8xf32>
      %81 = arith.mulf %5, %80 : vector<64x8xf32>
      %cst_51 = arith.constant dense<0.000000e+00> : vector<64xf32>
      %82 = vector.multi_reduction <add>, %81, %cst_51 [1] : vector<64x8xf32> to vector<64xf32>
      %83 = vector.shape_cast %82 : vector<64xf32> to vector<64x1xf32>
      %84 = arith.addf %83, %6 : vector<64x1xf32>
      %cst_52 = arith.constant 0.000000e+00 : f32
      %85 = vector.broadcast %cst_52 : f32 to vector<64x1xf32>
      %86 = arith.subf %85, %84 : vector<64x1xf32>
      %87 = math.exp %86 : vector<64x1xf32>
      %cst_53 = arith.constant 1.000000e+00 : f32
      %88 = vector.broadcast %cst_53 : f32 to vector<64x1xf32>
      %89 = arith.addf %88, %87 : vector<64x1xf32>
      %cst_54 = arith.constant 1.000000e+00 : f32
      %90 = vector.broadcast %cst_54 : f32 to vector<64x1xf32>
      %91 = arith.divf %90, %89 : vector<64x1xf32>
      %92 = vector.broadcast %91 : vector<64x1xf32> to vector<64x256xf32>
      %93 = arith.mulf %68, %92 : vector<64x256xf32>
      %94 = arith.index_cast %arg12 : i32 to index
      %c0_55 = arith.constant 0 : index
      %c0_56 = arith.constant 0 : index
      %95 = vector.load %arg10[%94, %c0_55, %c0_56] : memref<2x64x256xf32, #tpu.memory_space<vmem>>, vector<1x64x256xf32>
      %96 = vector.shape_cast %95 : vector<1x64x256xf32> to vector<64x256xf32>
      %97 = vector.shape_cast %93 : vector<64x256xf32> to vector<1x64x256xf32>
      tpu.vector_store %arg10[%94, %c0_55, %c0_56], %97 {strides = array<i32>} : memref<2x64x256xf32, #tpu.memory_space<vmem>>, vector<1x64x256xf32>,
    }
    %c2_i32_13 = arith.constant 2 : i32
    return
  }
  func.func @transform_0(%arg0: i32) -> (i32, i32, i32) {
    %c0_i32 = arith.constant 0 : i32
    %c0_i32_0 = arith.constant 0 : i32
    %c0_i32_1 = arith.constant 0 : i32
    return %arg0, %c0_i32, %c0_i32_0 : i32, i32, i32
  }
  func.func @transform_1(%arg0: i32) -> (i32, i32) {
    %c0_i32 = arith.constant 0 : i32
    %c0_i32_0 = arith.constant 0 : i32
    %c0_i32_1 = arith.constant 0 : i32
    return %c0_i32, %c0_i32_0 : i32, i32
  }
  func.func @transform_2(%arg0: i32) -> (i32, i32, i32) {
    %c0_i32 = arith.constant 0 : i32
    %c0_i32_0 = arith.constant 0 : i32
    %c0_i32_1 = arith.constant 0 : i32
    %c0_i32_2 = arith.constant 0 : i32
    return %c0_i32, %c0_i32_0, %c0_i32_1 : i32, i32, i32
  }
  func.func @transform_3(%arg0: i32) -> (i32, i32) {
    %c0_i32 = arith.constant 0 : i32
    %c0_i32_0 = arith.constant 0 : i32
    %c0_i32_1 = arith.constant 0 : i32
    return %c0_i32, %c0_i32_0 : i32, i32
  }
  func.func @transform_4(%arg0: i32) -> (i32, i32) {
    %c0_i32 = arith.constant 0 : i32
    %c0_i32_0 = arith.constant 0 : i32
    %c0_i32_1 = arith.constant 0 : i32
    return %c0_i32, %c0_i32_0 : i32, i32
  }
  func.func @transform_5(%arg0: i32) -> (i32, i32) {
    %c0_i32 = arith.constant 0 : i32
    %c0_i32_0 = arith.constant 0 : i32
    %c0_i32_1 = arith.constant 0 : i32
    return %c0_i32, %c0_i32_0 : i32, i32
  }
  func.func @transform_6(%arg0: i32) -> (i32, i32) {
    %c0_i32 = arith.constant 0 : i32
    %c0_i32_0 = arith.constant 0 : i32
    %c0_i32_1 = arith.constant 0 : i32
    return %c0_i32, %c0_i32_0 : i32, i32
  }
  func.func @transform_7(%arg0: i32) -> (i32, i32) {
    %c0_i32 = arith.constant 0 : i32
    %c0_i32_0 = arith.constant 0 : i32
    %c0_i32_1 = arith.constant 0 : i32
    return %c0_i32, %c0_i32_0 : i32, i32
  }
  func.func @transform_8(%arg0: i32) -> (i32, i32) {
    %c0_i32 = arith.constant 0 : i32
    %c0_i32_0 = arith.constant 0 : i32
    %c0_i32_1 = arith.constant 0 : i32
    return %c0_i32, %c0_i32_0 : i32, i32
  }
  func.func @transform_9(%arg0: i32) -> (i32, i32, i32) {
    %c0_i32 = arith.constant 0 : i32
    %c0_i32_0 = arith.constant 0 : i32
    %c0_i32_1 = arith.constant 0 : i32
    return %arg0, %c0_i32, %c0_i32_0 : i32, i32, i32
  }
}

</mosaic_0001>

<llo_original>
// kernel: tpu_custom_call.1
$region0: #{tpu_custom_call.1}
  #allocation0 [shape = 'u32[]', space=smem, size = 0x4, offset = 0x4, fixed_abs, tag = 'smem constant byte address 0x4 - core index']
  #allocation1 [shape = 'u32[144,128]{1,0:T(1,128)}', space=vmem, size = 0x12000, scoped, tag = 'internal scratch']
  #allocation2 [shape = 'f32[288,256]{1,0:T(8,128)}', space=vmem, size = 0x48000, scoped, tag = 'scratch operand']
  %s0 = inlined_call_operand.vmem [shape: f32[2,32,256], index: 0, kind: input, shape index: {}]
  %s1 = inlined_call_operand.vmem [shape: f32[64,288], index: 1, kind: input, shape index: {}]
  %s2 = inlined_call_operand.vmem [shape: f32[9,1,256], index: 2, kind: input, shape index: {}]
  %s3 = inlined_call_operand.vmem [shape: f32[64,1], index: 3, kind: input, shape index: {}]
  %s4 = inlined_call_operand.vmem [shape: f32[64,1], index: 4, kind: input, shape index: {}]
  %s5 = inlined_call_operand.vmem [shape: f32[64,8], index: 5, kind: input, shape index: {}]
  %s6 = inlined_call_operand.vmem [shape: f32[1,8], index: 6, kind: input, shape index: {}]
  %s7 = inlined_call_operand.vmem [shape: f32[64,8], index: 7, kind: input, shape index: {}]
  %s8 = inlined_call_operand.vmem [shape: f32[64,1], index: 8, kind: input, shape index: {}]
  %s9 = inlined_call_operand.hbm [shape: f32[2,64,256], index: 9, kind: output, shape index: {}]
  %s10 = sld [smem:[#allocation0]]
  $region53: #{tpu_custom_call.1} parent=0
    _
  %s12 = ssub.s32 1, %s10
  %s13 = scalar_select 0, %s12, %s10
  $region1: #{tpu_custom_call.1} parent=0
    #allocation3 [shape = 'u8[131072]{0}', space=vmem, size = 0x20000, scoped, tag = 'output window, operand 0, single buffered']
    #allocation4 [shape = 's32[1]{0}', space=sflag, size = 0x4, scoped, tag = 'scoped memory for tpu_custom_call.1']
    %14 = vsyncpa [#allocation4], 0
    // Predicated region
    $region2: #{tpu_custom_call.1} parent=1 // pred_check
      _
    $region3: #{tpu_custom_call.1} parent=1 // pred_check_branch
      %16 = sbr.rel (0) target = $region5
    $region4: #{tpu_custom_call.1} parent=1 // pred_region
      _
    $region5: #{tpu_custom_call.1} parent=1 // pred_fallthru
      _
    // Predicated region
    $region6: #{tpu_custom_call.1} parent=1 // pred_check
      _
    $region7: #{tpu_custom_call.1} parent=1 // pred_check_branch
      %18 = sbr.rel (0) target = $region9
    $region8: #{tpu_custom_call.1} parent=1 // pred_region
      _
    $region9: #{tpu_custom_call.1} parent=1 // pred_fallthru
      _
    // Predicated region
    $region10: #{tpu_custom_call.1} parent=1 // pred_check
      _
    $region11: #{tpu_custom_call.1} parent=1 // pred_check_branch
      %20 = sbr.rel (0) target = $region13
    $region12: #{tpu_custom_call.1} parent=1 // pred_region
      _
    $region13: #{tpu_custom_call.1} parent=1 // pred_fallthru
      _
    // Predicated region
    $region14: #{tpu_custom_call.1} parent=1 // pred_check
      _
    $region15: #{tpu_custom_call.1} parent=1 // pred_check_branch
      %22 = sbr.rel (0) target = $region17
    $region16: #{tpu_custom_call.1} parent=1 // pred_region
      _
    $region17: #{tpu_custom_call.1} parent=1 // pred_fallthru
      _
    // Predicated region
    $region18: #{tpu_custom_call.1} parent=1 // pred_check
      _
    $region19: #{tpu_custom_call.1} parent=1 // pred_check_branch
      %24 = sbr.rel (0) target = $region21
    $region20: #{tpu_custom_call.1} parent=1 // pred_region
      _
    $region21: #{tpu_custom_call.1} parent=1 // pred_fallthru
      _
    // Predicated region
    $region22: #{tpu_custom_call.1} parent=1 // pred_check
      _
    $region23: #{tpu_custom_call.1} parent=1 // pred_check_branch
      %26 = sbr.rel (0) target = $region25
    $region24: #{tpu_custom_call.1} parent=1 // pred_region
      _
    $region25: #{tpu_custom_call.1} parent=1 // pred_fallthru
      _
    // Predicated region
    $region26: #{tpu_custom_call.1} parent=1 // pred_check
      _
    $region27: #{tpu_custom_call.1} parent=1 // pred_check_branch
      %28 = sbr.rel (0) target = $region29
    $region28: #{tpu_custom_call.1} parent=1 // pred_region
      _
    $region29: #{tpu_custom_call.1} parent=1 // pred_fallthru
      _
    // Predicated region
    $region30: #{tpu_custom_call.1} parent=1 // pred_check
      _
    $region31: #{tpu_custom_call.1} parent=1 // pred_check_branch
      %30 = sbr.rel (0) target = $region33
    $region32: #{tpu_custom_call.1} parent=1 // pred_region
      _
    $region33: #{tpu_custom_call.1} parent=1 // pred_fallthru
      _
    // Predicated region
    $region34: #{tpu_custom_call.1} parent=1 // pred_check
      _
    $region35: #{tpu_custom_call.1} parent=1 // pred_check_branch
      %32 = sbr.rel (0) target = $region37
    $region36: #{tpu_custom_call.1} parent=1 // pred_region
      _
    $region37: #{tpu_custom_call.1} parent=1 // pred_fallthru
      _
    %v33 = vld [vmem:[%s1] sm:$0xff]
    %v34 = vld [vmem:[%s1 + $0x8] sm:$0xff]
    %v35 = vld [vmem:[%s1 + $0x10] sm:$0xff]
    %v36 = vld [vmem:[%s1 + $0x18] sm:$0xff]
    %v37 = vld [vmem:[%s1 + $0x20] sm:$0xff]
    %v38 = vld [vmem:[%s1 + $0x28] sm:$0xff]
    %v39 = vld [vmem:[%s1 + $0x30] sm:$0xff]
    %v40 = vld [vmem:[%s1 + $0x38] sm:$0xff]
    %v41 = vld [vmem:[%s1 + $0x40] sm:$0xff]
    %v42 = vld [vmem:[%s1 + $0x48] sm:$0xff]
    %v43 = vld [vmem:[%s1 + $0x50] sm:$0xff]
    %v44 = vld [vmem:[%s1 + $0x58] sm:$0xff]
    %v45 = vld [vmem:[%s1 + $0x60] sm:$0xff]
    %v46 = vld [vmem:[%s1 + $0x68] sm:$0xff]
    %v47 = vld [vmem:[%s1 + $0x70] sm:$0xff]
    %v48 = vld [vmem:[%s1 + $0x78] sm:$0xff]
    %v49 = vld [vmem:[%s1 + $0x80] sm:$0xff]
    %v50 = vld [vmem:[%s1 + $0x88] sm:$0xff]
    %v51 = vld [vmem:[%s1 + $0x90] sm:$0xff]
    %v52 = vld [vmem:[%s1 + $0x98] sm:$0xff]
    %v53 = vld [vmem:[%s1 + $0xa0] sm:$0xff]
    %v54 = vld [vmem:[%s1 + $0xa8] sm:$0xff]
    %v55 = vld [vmem:[%s1 + $0xb0] sm:$0xff]
    %v56 = vld [vmem:[%s1 + $0xb8] sm:$0xff]
    %v57 = vld [vmem:[%s3] sm:$0xff]
    %v58 = vld [vmem:[%s3 + $0x8] sm:$0xff]
    %v59 = vld [vmem:[%s3 + $0x10] sm:$0xff]
    %v60 = vld [vmem:[%s3 + $0x18] sm:$0xff]
    %v61 = vld [vmem:[%s3 + $0x20] sm:$0xff]
    %v62 = vld [vmem:[%s3 + $0x28] sm:$0xff]
    %v63 = vld [vmem:[%s3 + $0x30] sm:$0xff]
    %v64 = vld [vmem:[%s3 + $0x38] sm:$0xff]
    %v65 = vld [vmem:[%s4] sm:$0xff]
    %v66 = vld [vmem:[%s4 + $0x8] sm:$0xff]
    %v67 = vld [vmem:[%s4 + $0x10] sm:$0xff]
    %v68 = vld [vmem:[%s4 + $0x18] sm:$0xff]
    %v69 = vld [vmem:[%s4 + $0x20] sm:$0xff]
    %v70 = vld [vmem:[%s4 + $0x28] sm:$0xff]
    %v71 = vld [vmem:[%s4 + $0x30] sm:$0xff]
    %v72 = vld [vmem:[%s4 + $0x38] sm:$0xff]
    %v73 = vld [vmem:[%s5] sm:$0xff]
    %v74 = vld [vmem:[%s5 + $0x8] sm:$0xff]
    %v75 = vld [vmem:[%s5 + $0x10] sm:$0xff]
    %v76 = vld [vmem:[%s5 + $0x18] sm:$0xff]
    %v77 = vld [vmem:[%s5 + $0x20] sm:$0xff]
    %v78 = vld [vmem:[%s5 + $0x28] sm:$0xff]
    %v79 = vld [vmem:[%s5 + $0x30] sm:$0xff]
    %v80 = vld [vmem:[%s5 + $0x38] sm:$0xff]
    %v81 = vld [vmem:[%s6] sm:$0x1]
    %v82 = vld [vmem:[%s7] sm:$0xff]
    %v83 = vld [vmem:[%s7 + $0x8] sm:$0xff]
    %v84 = vld [vmem:[%s7 + $0x10] sm:$0xff]
    %v85 = vld [vmem:[%s7 + $0x18] sm:$0xff]
    %v86 = vld [vmem:[%s7 + $0x20] sm:$0xff]
    %v87 = vld [vmem:[%s7 + $0x28] sm:$0xff]
    %v88 = vld [vmem:[%s7 + $0x30] sm:$0xff]
    %v89 = vld [vmem:[%s7 + $0x38] sm:$0xff]
    %v90 = vld [vmem:[%s8] sm:$0xff]
    %v91 = vld [vmem:[%s8 + $0x8] sm:$0xff]
    %v92 = vld [vmem:[%s8 + $0x10] sm:$0xff]
    %v93 = vld [vmem:[%s8 + $0x18] sm:$0xff]
    %v94 = vld [vmem:[%s8 + $0x20] sm:$0xff]
    %v95 = vld [vmem:[%s8 + $0x28] sm:$0xff]
    %v96 = vld [vmem:[%s8 + $0x30] sm:$0xff]
    %v97 = vld [vmem:[%s8 + $0x38] sm:$0xff]
    loop: start=0, step=1, limit=2
    $region38: #{tpu_custom_call.1} parent=1 // loop_pre_header
      _
    $region39: #{tpu_custom_call.1} parent=1 // loop_header
      %s99 = sphi 0, %s103
      %p100 = scmp.ge.s32.totalorder %s99, 2
    $region40: #{tpu_custom_call.1} parent=1 // loop_header_branch
      %102 = sbr.rel (%p100) target = $region44
    $region41: #{tpu_custom_call.1} parent=1 // loop_body
      %s104 = smul.u32 %s99, 8
      %s105 = smul.addr %s104, 8
      %s106 = scalar_lea.vmem %s0, %s105
      %v107 = vld [vmem:[%s106] sm:$0xff]
      %v108 = vld [vmem:[%s106 + $0x8] sm:$0xff]
      %v109 = vld [vmem:[%s106 + $0x10] sm:$0xff]
      %v110 = vld [vmem:[%s106 + $0x18] sm:$0xff]
      %v111 = vld [vmem:[%s106 + $0x20] sm:$0xff]
      %v112 = vld [vmem:[%s106 + $0x28] sm:$0xff]
      %v113 = vld [vmem:[%s106 + $0x30] sm:$0xff]
      %v114 = vld [vmem:[%s106 + $0x38] sm:$0xff]
      %115 = vrot.lane.b32.xlu0 %v107, 17
      %v116 = vpop.permute.xlu0 %115
      %117 = vrot.lane.b32.xlu0 %v109, 17
      %v118 = vpop.permute.xlu0 %117
      %119 = vrot.lane.b32.xlu0 %v111, 17
      %v120 = vpop.permute.xlu0 %119
      %121 = vrot.lane.b32.xlu0 %v113, 17
      %v122 = vpop.permute.xlu0 %121
      %123 = vrot.lane.b32.xlu0 %v108, 17
      %v124 = vpop.permute.xlu0 %123
      %125 = vrot.lane.b32.xlu0 %v110, 17
      %v126 = vpop.permute.xlu0 %125
      %127 = vrot.lane.b32.xlu0 %v112, 17
      %v128 = vpop.permute.xlu0 %127
      %129 = vrot.lane.b32.xlu0 %v114, 17
      %v130 = vpop.permute.xlu0 %129
      %v131 = vlaneseq
      %v132 = vand.u32 %v131, 127
      %vm133 = vcmp.lt.s32.totalorder %v132, 17
      %v134 = vsel %vm133, %v116, %v124
      %v135 = vsel %vm133, %v118, %v126
      %v136 = vsel %vm133, %v120, %v128
      %v137 = vsel %vm133, %v122, %v130
      %v138 = vsel %vm133, %v124, %v116
      %v139 = vsel %vm133, %v126, %v118
      %v140 = vsel %vm133, %v128, %v120
      %v141 = vsel %vm133, %v130, %v122
      %v142 = vld [vmem:[%s2] sm:$0x3]
      %v144 = vlaneseq
      %v145 = vshrl.u32 %v144, 7
      %v146 = vsub.s32 0, %v145
      %v147 = vrot.slane %v142, %v146
      %v148 = vlaneseq
      %v149 = vshrl.u32 %v148, 7
      %v150 = vsub.s32 1, %v149
      %v151 = vrot.slane %v142, %v150
      %v154 = vmul.f32 %v138, %v147
      %v155 = vmul.f32 %v134, %v151
      %v156 = vmul.f32 %v139, %v147
      %v157 = vmul.f32 %v135, %v151
      %v158 = vmul.f32 %v140, %v147
      %v159 = vmul.f32 %v136, %v151
      %v160 = vmul.f32 %v141, %v147
      %v161 = vmul.f32 %v137, %v151
      %162 = vst [vmem:[#allocation2] sm:$0xff] %v154
      %163 = vst [vmem:[#allocation2 + $0x8] sm:$0xff] %v155
      %164 = vst [vmem:[#allocation2 + $0x10] sm:$0xff] %v156
      %165 = vst [vmem:[#allocation2 + $0x18] sm:$0xff] %v157
      %166 = vst [vmem:[#allocation2 + $0x20] sm:$0xff] %v158
      %167 = vst [vmem:[#allocation2 + $0x28] sm:$0xff] %v159
      %168 = vst [vmem:[#allocation2 + $0x30] sm:$0xff] %v160
      %169 = vst [vmem:[#allocation2 + $0x38] sm:$0xff] %v161
      %170 = vrot.lane.b32.xlu0 %v107, 16
      %v171 = vpop.permute.xlu0 %170
      %172 = vrot.lane.b32.xlu0 %v109, 16
      %v173 = vpop.permute.xlu0 %172
      %174 = vrot.lane.b32.xlu0 %v111, 16
      %v175 = vpop.permute.xlu0 %174
      %176 = vrot.lane.b32.xlu0 %v113, 16
      %v177 = vpop.permute.xlu0 %176
      %178 = vrot.lane.b32.xlu0 %v108, 16
      %v179 = vpop.permute.xlu0 %178
      %180 = vrot.lane.b32.xlu0 %v110, 16
      %v181 = vpop.permute.xlu0 %180
      %182 = vrot.lane.b32.xlu0 %v112, 16
      %v183 = vpop.permute.xlu0 %182
      %184 = vrot.lane.b32.xlu0 %v114, 16
      %v185 = vpop.permute.xlu0 %184
      %vm186 = vcmp.lt.s32.totalorder %v132, 16
      %v187 = vsel %vm186, %v171, %v179
      %v188 = vsel %vm186, %v173, %v181
      %v189 = vsel %vm186, %v175, %v183
      %v190 = vsel %vm186, %v177, %v185
      %v191 = vsel %vm186, %v179, %v171
      %v192 = vsel %vm186, %v181, %v173
      %v193 = vsel %vm186, %v183, %v175
      %v194 = vsel %vm186, %v185, %v177
      %s195 = scalar_lea.vmem %s2, 2
      %v196 = vld [vmem:[%s195] sm:$0x3]
      %v198 = vlaneseq
      %v199 = vshrl.u32 %v198, 7
      %v200 = vsub.s32 0, %v199
      %v201 = vrot.slane %v196, %v200
      %v202 = vlaneseq
      %v203 = vshrl.u32 %v202, 7
      %v204 = vsub.s32 1, %v203
      %v205 = vrot.slane %v196, %v204
      %v208 = vmul.f32 %v191, %v201
      %v209 = vmul.f32 %v187, %v205
      %v210 = vmul.f32 %v192, %v201
      %v211 = vmul.f32 %v188, %v205
      %v212 = vmul.f32 %v193, %v201
      %v213 = vmul.f32 %v189, %v205
      %v214 = vmul.f32 %v194, %v201
      %v215 = vmul.f32 %v190, %v205
      %216 = vst [vmem:[#allocation2 + $0x40] sm:$0xff] %v208
      %217 = vst [vmem:[#allocation2 + $0x48] sm:$0xff] %v209
      %218 = vst [vmem:[#allocation2 + $0x50] sm:$0xff] %v210
      %219 = vst [vmem:[#allocation2 + $0x58] sm:$0xff] %v211
      %220 = vst [vmem:[#allocation2 + $0x60] sm:$0xff] %v212
      %221 = vst [vmem:[#allocation2 + $0x68] sm:$0xff] %v213
      %222 = vst [vmem:[#allocation2 + $0x70] sm:$0xff] %v214
      %223 = vst [vmem:[#allocation2 + $0x78] sm:$0xff] %v215
      %224 = vrot.lane.b32.xlu0 %v107, 15
      %v225 = vpop.permute.xlu0 %224
      %226 = vrot.lane.b32.xlu0 %v109, 15
      %v227 = vpop.permute.xlu0 %226
      %228 = vrot.lane.b32.xlu0 %v111, 15
      %v229 = vpop.permute.xlu0 %228
      %230 = vrot.lane.b32.xlu0 %v113, 15
      %v231 = vpop.permute.xlu0 %230
      %232 = vrot.lane.b32.xlu0 %v108, 15
      %v233 = vpop.permute.xlu0 %232
      %234 = vrot.lane.b32.xlu0 %v110, 15
      %v235 = vpop.permute.xlu0 %234
      %236 = vrot.lane.b32.xlu0 %v112, 15
      %v237 = vpop.permute.xlu0 %236
      %238 = vrot.lane.b32.xlu0 %v114, 15
      %v239 = vpop.permute.xlu0 %238
      %vm240 = vcmp.lt.s32.totalorder %v132, 15
      %v241 = vsel %vm240, %v225, %v233
      %v242 = vsel %vm240, %v227, %v235
      %v243 = vsel %vm240, %v229, %v237
      %v244 = vsel %vm240, %v231, %v239
      %v245 = vsel %vm240, %v233, %v225
      %v246 = vsel %vm240, %v235, %v227
      %v247 = vsel %vm240, %v237, %v229
      %v248 = vsel %vm240, %v239, %v231
      %s249 = scalar_lea.vmem %s2, 4
      %v250 = vld [vmem:[%s249] sm:$0x3]
      %v252 = vlaneseq
      %v253 = vshrl.u32 %v252, 7
      %v254 = vsub.s32 0, %v253
      %v255 = vrot.slane %v250, %v254
      %v256 = vlaneseq
      %v257 = vshrl.u32 %v256, 7
      %v258 = vsub.s32 1, %v257
      %v259 = vrot.slane %v250, %v258
      %v262 = vmul.f32 %v245, %v255
      %v263 = vmul.f32 %v241, %v259
      %v264 = vmul.f32 %v246, %v255
      %v265 = vmul.f32 %v242, %v259
      %v266 = vmul.f32 %v247, %v255
      %v267 = vmul.f32 %v243, %v259
      %v268 = vmul.f32 %v248, %v255
      %v269 = vmul.f32 %v244, %v259
      %270 = vst [vmem:[#allocation2 + $0x80] sm:$0xff] %v262
      %271 = vst [vmem:[#allocation2 + $0x88] sm:$0xff] %v263
      %272 = vst [vmem:[#allocation2 + $0x90] sm:$0xff] %v264
      %273 = vst [vmem:[#allocation2 + $0x98] sm:$0xff] %v265
      %274 = vst [vmem:[#allocation2 + $0xa0] sm:$0xff] %v266
      %275 = vst [vmem:[#allocation2 + $0xa8] sm:$0xff] %v267
      %276 = vst [vmem:[#allocation2 + $0xb0] sm:$0xff] %v268
      %277 = vst [vmem:[#allocation2 + $0xb8] sm:$0xff] %v269
      %278 = vrot.lane.b32.xlu0 %v107, 1
      %v279 = vpop.permute.xlu0 %278
      %280 = vrot.lane.b32.xlu0 %v109, 1
      %v281 = vpop.permute.xlu0 %280
      %282 = vrot.lane.b32.xlu0 %v111, 1
      %v283 = vpop.permute.xlu0 %282
      %284 = vrot.lane.b32.xlu0 %v113, 1
      %v285 = vpop.permute.xlu0 %284
      %286 = vrot.lane.b32.xlu0 %v108, 1
      %v287 = vpop.permute.xlu0 %286
      %288 = vrot.lane.b32.xlu0 %v110, 1
      %v289 = vpop.permute.xlu0 %288
      %290 = vrot.lane.b32.xlu0 %v112, 1
      %v291 = vpop.permute.xlu0 %290
      %292 = vrot.lane.b32.xlu0 %v114, 1
      %v293 = vpop.permute.xlu0 %292
      %vm294 = vcmp.lt.s32.totalorder %v132, 1
      %v295 = vsel %vm294, %v279, %v287
      %v296 = vsel %vm294, %v281, %v289
      %v297 = vsel %vm294, %v283, %v291
      %v298 = vsel %vm294, %v285, %v293
      %v299 = vsel %vm294, %v287, %v279
      %v300 = vsel %vm294, %v289, %v281
      %v301 = vsel %vm294, %v291, %v283
      %v302 = vsel %vm294, %v293, %v285
      %s303 = scalar_lea.vmem %s2, 6
      %v304 = vld [vmem:[%s303] sm:$0x3]
      %v306 = vlaneseq
      %v307 = vshrl.u32 %v306, 7
      %v308 = vsub.s32 0, %v307
      %v309 = vrot.slane %v304, %v308
      %v310 = vlaneseq
      %v311 = vshrl.u32 %v310, 7
      %v312 = vsub.s32 1, %v311
      %v313 = vrot.slane %v304, %v312
      %v316 = vmul.f32 %v299, %v309
      %v317 = vmul.f32 %v295, %v313
      %v318 = vmul.f32 %v300, %v309
      %v319 = vmul.f32 %v296, %v313
      %v320 = vmul.f32 %v301, %v309
      %v321 = vmul.f32 %v297, %v313
      %v322 = vmul.f32 %v302, %v309
      %v323 = vmul.f32 %v298, %v313
      %324 = vst [vmem:[#allocation2 + $0xc0] sm:$0xff] %v316
      %325 = vst [vmem:[#allocation2 + $0xc8] sm:$0xff] %v317
      %326 = vst [vmem:[#allocation2 + $0xd0] sm:$0xff] %v318
      %327 = vst [vmem:[#allocation2 + $0xd8] sm:$0xff] %v319
      %328 = vst [vmem:[#allocation2 + $0xe0] sm:$0xff] %v320
      %329 = vst [vmem:[#allocation2 + $0xe8] sm:$0xff] %v321
      %330 = vst [vmem:[#allocation2 + $0xf0] sm:$0xff] %v322
      %331 = vst [vmem:[#allocation2 + $0xf8] sm:$0xff] %v323
      %332 = vst [vmem:[#allocation2 + $0x100] sm:$0xff] %v107
      %333 = vst [vmem:[#allocation2 + $0x108] sm:$0xff] %v108
      %334 = vst [vmem:[#allocation2 + $0x110] sm:$0xff] %v109
      %335 = vst [vmem:[#allocation2 + $0x118] sm:$0xff] %v110
      %336 = vst [vmem:[#allocation2 + $0x120] sm:$0xff] %v111
      %337 = vst [vmem:[#allocation2 + $0x128] sm:$0xff] %v112
      %338 = vst [vmem:[#allocation2 + $0x130] sm:$0xff] %v113
      %339 = vst [vmem:[#allocation2 + $0x138] sm:$0xff] %v114
      %340 = vrot.lane.b32.xlu0 %v107, 127
      %v341 = vpop.permute.xlu0 %340
      %342 = vrot.lane.b32.xlu0 %v109, 127
      %v343 = vpop.permute.xlu0 %342
      %344 = vrot.lane.b32.xlu0 %v111, 127
      %v345 = vpop.permute.xlu0 %344
      %346 = vrot.lane.b32.xlu0 %v113, 127
      %v347 = vpop.permute.xlu0 %346
      %348 = vrot.lane.b32.xlu0 %v108, 127
      %v349 = vpop.permute.xlu0 %348
      %350 = vrot.lane.b32.xlu0 %v110, 127
      %v351 = vpop.permute.xlu0 %350
      %352 = vrot.lane.b32.xlu0 %v112, 127
      %v353 = vpop.permute.xlu0 %352
      %354 = vrot.lane.b32.xlu0 %v114, 127
      %v355 = vpop.permute.xlu0 %354
      %vm356 = vcmp.lt.s32.totalorder %v132, 127
      %v357 = vsel %vm356, %v341, %v349
      %v358 = vsel %vm356, %v343, %v351
      %v359 = vsel %vm356, %v345, %v353
      %v360 = vsel %vm356, %v347, %v355
      %v361 = vsel %vm356, %v349, %v341
      %v362 = vsel %vm356, %v351, %v343
      %v363 = vsel %vm356, %v353, %v345
      %v364 = vsel %vm356, %v355, %v347
      %s365 = scalar_lea.vmem %s2, 10
      %v366 = vld [vmem:[%s365] sm:$0x3]
      %v368 = vlaneseq
      %v369 = vshrl.u32 %v368, 7
      %v370 = vsub.s32 0, %v369
      %v371 = vrot.slane %v366, %v370
      %v372 = vlaneseq
      %v373 = vshrl.u32 %v372, 7
      %v374 = vsub.s32 1, %v373
      %v375 = vrot.slane %v366, %v374
      %v378 = vmul.f32 %v357, %v371
      %v379 = vmul.f32 %v361, %v375
      %v380 = vmul.f32 %v358, %v371
      %v381 = vmul.f32 %v362, %v375
      %v382 = vmul.f32 %v359, %v371
      %v383 = vmul.f32 %v363, %v375
      %v384 = vmul.f32 %v360, %v371
      %v385 = vmul.f32 %v364, %v375
      %386 = vst [vmem:[#allocation2 + $0x140] sm:$0xff] %v378
      %387 = vst [vmem:[#allocation2 + $0x148] sm:$0xff] %v379
      %388 = vst [vmem:[#allocation2 + $0x150] sm:$0xff] %v380
      %389 = vst [vmem:[#allocation2 + $0x158] sm:$0xff] %v381
      %390 = vst [vmem:[#allocation2 + $0x160] sm:$0xff] %v382
      %391 = vst [vmem:[#allocation2 + $0x168] sm:$0xff] %v383
      %392 = vst [vmem:[#allocation2 + $0x170] sm:$0xff] %v384
      %393 = vst [vmem:[#allocation2 + $0x178] sm:$0xff] %v385
      %394 = vrot.lane.b32.xlu0 %v107, 113
      %v395 = vpop.permute.xlu0 %394
      %396 = vrot.lane.b32.xlu0 %v109, 113
      %v397 = vpop.permute.xlu0 %396
      %398 = vrot.lane.b32.xlu0 %v111, 113
      %v399 = vpop.permute.xlu0 %398
      %400 = vrot.lane.b32.xlu0 %v113, 113
      %v401 = vpop.permute.xlu0 %400
      %402 = vrot.lane.b32.xlu0 %v108, 113
      %v403 = vpop.permute.xlu0 %402
      %404 = vrot.lane.b32.xlu0 %v110, 113
      %v405 = vpop.permute.xlu0 %404
      %406 = vrot.lane.b32.xlu0 %v112, 113
      %v407 = vpop.permute.xlu0 %406
      %408 = vrot.lane.b32.xlu0 %v114, 113
      %v409 = vpop.permute.xlu0 %408
      %vm410 = vcmp.lt.s32.totalorder %v132, 113
      %v411 = vsel %vm410, %v395, %v403
      %v412 = vsel %vm410, %v397, %v405
      %v413 = vsel %vm410, %v399, %v407
      %v414 = vsel %vm410, %v401, %v409
      %v415 = vsel %vm410, %v403, %v395
      %v416 = vsel %vm410, %v405, %v397
      %v417 = vsel %vm410, %v407, %v399
      %v418 = vsel %vm410, %v409, %v401
      %s419 = scalar_lea.vmem %s2, 12
      %v420 = vld [vmem:[%s419] sm:$0x3]
      %v422 = vlaneseq
      %v423 = vshrl.u32 %v422, 7
      %v424 = vsub.s32 0, %v423
      %v425 = vrot.slane %v420, %v424
      %v426 = vlaneseq
      %v427 = vshrl.u32 %v426, 7
      %v428 = vsub.s32 1, %v427
      %v429 = vrot.slane %v420, %v428
      %v432 = vmul.f32 %v411, %v425
      %v433 = vmul.f32 %v415, %v429
      %v434 = vmul.f32 %v412, %v425
      %v435 = vmul.f32 %v416, %v429
      %v436 = vmul.f32 %v413, %v425
      %v437 = vmul.f32 %v417, %v429
      %v438 = vmul.f32 %v414, %v425
      %v439 = vmul.f32 %v418, %v429
      %440 = vst [vmem:[#allocation2 + $0x180] sm:$0xff] %v432
      %441 = vst [vmem:[#allocation2 + $0x188] sm:$0xff] %v433
      %442 = vst [vmem:[#allocation2 + $0x190] sm:$0xff] %v434
      %443 = vst [vmem:[#allocation2 + $0x198] sm:$0xff] %v435
      %444 = vst [vmem:[#allocation2 + $0x1a0] sm:$0xff] %v436
      %445 = vst [vmem:[#allocation2 + $0x1a8] sm:$0xff] %v437
      %446 = vst [vmem:[#allocation2 + $0x1b0] sm:$0xff] %v438
      %447 = vst [vmem:[#allocation2 + $0x1b8] sm:$0xff] %v439
      %448 = vrot.lane.b32.xlu0 %v107, 112
      %v449 = vpop.permute.xlu0 %448
      %450 = vrot.lane.b32.xlu0 %v109, 112
      %v451 = vpop.permute.xlu0 %450
      %452 = vrot.lane.b32.xlu0 %v111, 112
      %v453 = vpop.permute.xlu0 %452
      %454 = vrot.lane.b32.xlu0 %v113, 112
      %v455 = vpop.permute.xlu0 %454
      %456 = vrot.lane.b32.xlu0 %v108, 112
      %v457 = vpop.permute.xlu0 %456
      %458 = vrot.lane.b32.xlu0 %v110, 112
      %v459 = vpop.permute.xlu0 %458
      %460 = vrot.lane.b32.xlu0 %v112, 112
      %v461 = vpop.permute.xlu0 %460
      %462 = vrot.lane.b32.xlu0 %v114, 112
      %v463 = vpop.permute.xlu0 %462
      %vm464 = vcmp.lt.s32.totalorder %v132, 112
      %v465 = vsel %vm464, %v449, %v457
      %v466 = vsel %vm464, %v451, %v459
      %v467 = vsel %vm464, %v453, %v461
      %v468 = vsel %vm464, %v455, %v463
      %v469 = vsel %vm464, %v457, %v449
      %v470 = vsel %vm464, %v459, %v451
      %v471 = vsel %vm464, %v461, %v453
      %v472 = vsel %vm464, %v463, %v455
      %s473 = scalar_lea.vmem %s2, 14
      %v474 = vld [vmem:[%s473] sm:$0x3]
      %v476 = vlaneseq
      %v477 = vshrl.u32 %v476, 7
      %v478 = vsub.s32 0, %v477
      %v479 = vrot.slane %v474, %v478
      %v480 = vlaneseq
      %v481 = vshrl.u32 %v480, 7
      %v482 = vsub.s32 1, %v481
      %v483 = vrot.slane %v474, %v482
      %v486 = vmul.f32 %v465, %v479
      %v487 = vmul.f32 %v469, %v483
      %v488 = vmul.f32 %v466, %v479
      %v489 = vmul.f32 %v470, %v483
      %v490 = vmul.f32 %v467, %v479
      %v491 = vmul.f32 %v471, %v483
      %v492 = vmul.f32 %v468, %v479
      %v493 = vmul.f32 %v472, %v483
      %494 = vst [vmem:[#allocation2 + $0x1c0] sm:$0xff] %v486
      %495 = vst [vmem:[#allocation2 + $0x1c8] sm:$0xff] %v487
      %496 = vst [vmem:[#allocation2 + $0x1d0] sm:$0xff] %v488
      %497 = vst [vmem:[#allocation2 + $0x1d8] sm:$0xff] %v489
      %498 = vst [vmem:[#allocation2 + $0x1e0] sm:$0xff] %v490
      %499 = vst [vmem:[#allocation2 + $0x1e8] sm:$0xff] %v491
      %500 = vst [vmem:[#allocation2 + $0x1f0] sm:$0xff] %v492
      %501 = vst [vmem:[#allocation2 + $0x1f8] sm:$0xff] %v493
      %502 = vrot.lane.b32.xlu0 %v107, 111
      %v503 = vpop.permute.xlu0 %502
      %504 = vrot.lane.b32.xlu0 %v109, 111
      %v505 = vpop.permute.xlu0 %504
      %506 = vrot.lane.b32.xlu0 %v111, 111
      %v507 = vpop.permute.xlu0 %506
      %508 = vrot.lane.b32.xlu0 %v113, 111
      %v509 = vpop.permute.xlu0 %508
      %510 = vrot.lane.b32.xlu0 %v108, 111
      %v511 = vpop.permute.xlu0 %510
      %512 = vrot.lane.b32.xlu0 %v110, 111
      %v513 = vpop.permute.xlu0 %512
      %514 = vrot.lane.b32.xlu0 %v112, 111
      %v515 = vpop.permute.xlu0 %514
      %516 = vrot.lane.b32.xlu0 %v114, 111
      %v517 = vpop.permute.xlu0 %516
      %vm518 = vcmp.lt.s32.totalorder %v132, 111
      %v519 = vsel %vm518, %v503, %v511
      %v520 = vsel %vm518, %v505, %v513
      %v521 = vsel %vm518, %v507, %v515
      %v522 = vsel %vm518, %v509, %v517
      %v523 = vsel %vm518, %v511, %v503
      %v524 = vsel %vm518, %v513, %v505
      %v525 = vsel %vm518, %v515, %v507
      %v526 = vsel %vm518, %v517, %v509
      %s527 = scalar_lea.vmem %s2, 16
      %v528 = vld [vmem:[%s527] sm:$0x3]
      %v530 = vlaneseq
      %v531 = vshrl.u32 %v530, 7
      %v532 = vsub.s32 0, %v531
      %v533 = vrot.slane %v528, %v532
      %v534 = vlaneseq
      %v535 = vshrl.u32 %v534, 7
      %v536 = vsub.s32 1, %v535
      %v537 = vrot.slane %v528, %v536
      %v540 = vmul.f32 %v519, %v533
      %v541 = vmul.f32 %v523, %v537
      %v542 = vmul.f32 %v520, %v533
      %v543 = vmul.f32 %v524, %v537
      %v544 = vmul.f32 %v521, %v533
      %v545 = vmul.f32 %v525, %v537
      %v546 = vmul.f32 %v522, %v533
      %v547 = vmul.f32 %v526, %v537
      %548 = vst [vmem:[#allocation2 + $0x200] sm:$0xff] %v540
      %549 = vst [vmem:[#allocation2 + $0x208] sm:$0xff] %v541
      %550 = vst [vmem:[#allocation2 + $0x210] sm:$0xff] %v542
      %551 = vst [vmem:[#allocation2 + $0x218] sm:$0xff] %v543
      %552 = vst [vmem:[#allocation2 + $0x220] sm:$0xff] %v544
      %553 = vst [vmem:[#allocation2 + $0x228] sm:$0xff] %v545
      %554 = vst [vmem:[#allocation2 + $0x230] sm:$0xff] %v546
      %555 = vst [vmem:[#allocation2 + $0x238] sm:$0xff] %v547
      %v556 = vld [vmem:[#allocation2] sm:$0xff]
      %v557 = vld [vmem:[#allocation2 + $0x8] sm:$0xff]
      %v558 = vld [vmem:[#allocation2 + $0x10] sm:$0xff]
      %v559 = vld [vmem:[#allocation2 + $0x18] sm:$0xff]
      %v560 = vld [vmem:[#allocation2 + $0x20] sm:$0xff]
      %v561 = vld [vmem:[#allocation2 + $0x28] sm:$0xff]
      %v562 = vld [vmem:[#allocation2 + $0x30] sm:$0xff]
      %v563 = vld [vmem:[#allocation2 + $0x38] sm:$0xff]
      %v564 = vld [vmem:[#allocation2 + $0x40] sm:$0xff]
      %v565 = vld [vmem:[#allocation2 + $0x48] sm:$0xff]
      %v566 = vld [vmem:[#allocation2 + $0x50] sm:$0xff]
      %v567 = vld [vmem:[#allocation2 + $0x58] sm:$0xff]
      %v568 = vld [vmem:[#allocation2 + $0x60] sm:$0xff]
      %v569 = vld [vmem:[#allocation2 + $0x68] sm:$0xff]
      %v570 = vld [vmem:[#allocation2 + $0x70] sm:$0xff]
      %v571 = vld [vmem:[#allocation2 + $0x78] sm:$0xff]
      %v572 = vld [vmem:[#allocation2 + $0x80] sm:$0xff]
      %v573 = vld [vmem:[#allocation2 + $0x88] sm:$0xff]
      %v574 = vld [vmem:[#allocation2 + $0x90] sm:$0xff]
      %v575 = vld [vmem:[#allocation2 + $0x98] sm:$0xff]
      %v576 = vld [vmem:[#allocation2 + $0xa0] sm:$0xff]
      %v577 = vld [vmem:[#allocation2 + $0xa8] sm:$0xff]
      %v578 = vld [vmem:[#allocation2 + $0xb0] sm:$0xff]
      %v579 = vld [vmem:[#allocation2 + $0xb8] sm:$0xff]
      %v580 = vld [vmem:[#allocation2 + $0xc0] sm:$0xff]
      %v581 = vld [vmem:[#allocation2 + $0xc8] sm:$0xff]
      %v582 = vld [vmem:[#allocation2 + $0xd0] sm:$0xff]
      %v583 = vld [vmem:[#allocation2 + $0xd8] sm:$0xff]
      %v584 = vld [vmem:[#allocation2 + $0xe0] sm:$0xff]
      %v585 = vld [vmem:[#allocation2 + $0xe8] sm:$0xff]
      %v586 = vld [vmem:[#allocation2 + $0xf0] sm:$0xff]
      %v587 = vld [vmem:[#allocation2 + $0xf8] sm:$0xff]
      %v588 = vld [vmem:[#allocation2 + $0x100] sm:$0xff]
      %v589 = vld [vmem:[#allocation2 + $0x108] sm:$0xff]
      %v590 = vld [vmem:[#allocation2 + $0x110] sm:$0xff]
      %v591 = vld [vmem:[#allocation2 + $0x118] sm:$0xff]
      %v592 = vld [vmem:[#allocation2 + $0x120] sm:$0xff]
      %v593 = vld [vmem:[#allocation2 + $0x128] sm:$0xff]
      %v594 = vld [vmem:[#allocation2 + $0x130] sm:$0xff]
      %v595 = vld [vmem:[#allocation2 + $0x138] sm:$0xff]
      %v596 = vld [vmem:[#allocation2 + $0x140] sm:$0xff]
      %v597 = vld [vmem:[#allocation2 + $0x148] sm:$0xff]
      %v598 = vld [vmem:[#allocation2 + $0x150] sm:$0xff]
      %v599 = vld [vmem:[#allocation2 + $0x158] sm:$0xff]
      %v600 = vld [vmem:[#allocation2 + $0x160] sm:$0xff]
      %v601 = vld [vmem:[#allocation2 + $0x168] sm:$0xff]
      %v602 = vld [vmem:[#allocation2 + $0x170] sm:$0xff]
      %v603 = vld [vmem:[#allocation2 + $0x178] sm:$0xff]
      %v604 = vld [vmem:[#allocation2 + $0x180] sm:$0xff]
      %v605 = vld [vmem:[#allocation2 + $0x188] sm:$0xff]
      %v606 = vld [vmem:[#allocation2 + $0x190] sm:$0xff]
      %v607 = vld [vmem:[#allocation2 + $0x198] sm:$0xff]
      %v608 = vld [vmem:[#allocation2 + $0x1a0] sm:$0xff]
      %v609 = vld [vmem:[#allocation2 + $0x1a8] sm:$0xff]
      %v610 = vld [vmem:[#allocation2 + $0x1b0] sm:$0xff]
      %v611 = vld [vmem:[#allocation2 + $0x1b8] sm:$0xff]
      %v612 = vld [vmem:[#allocation2 + $0x1c0] sm:$0xff]
      %v613 = vld [vmem:[#allocation2 + $0x1c8] sm:$0xff]
      %v614 = vld [vmem:[#allocation2 + $0x1d0] sm:$0xff]
      %v615 = vld [vmem:[#allocation2 + $0x1d8] sm:$0xff]
      %v616 = vld [vmem:[#allocation2 + $0x1e0] sm:$0xff]
      %v617 = vld [vmem:[#allocation2 + $0x1e8] sm:$0xff]
      %v618 = vld [vmem:[#allocation2 + $0x1f0] sm:$0xff]
      %v619 = vld [vmem:[#allocation2 + $0x1f8] sm:$0xff]
      %v620 = vld [vmem:[#allocation2 + $0x200] sm:$0xff]
      %v621 = vld [vmem:[#allocation2 + $0x208] sm:$0xff]
      %v622 = vld [vmem:[#allocation2 + $0x210] sm:$0xff]
      %v623 = vld [vmem:[#allocation2 + $0x218] sm:$0xff]
      %v624 = vld [vmem:[#allocation2 + $0x220] sm:$0xff]
      %v625 = vld [vmem:[#allocation2 + $0x228] sm:$0xff]
      %v626 = vld [vmem:[#allocation2 + $0x230] sm:$0xff]
      %v627 = vld [vmem:[#allocation2 + $0x238] sm:$0xff]
      %629 = vset.pattern.permute.xlu0 0
      %630 = vperm.xlu0 %629, %v57
      %v631 = vpop.permute.xlu0 %630
      %634 = vset.pattern.permute.xlu0 0
      %635 = vperm.xlu0 %634, %v58
      %v636 = vpop.permute.xlu0 %635
      %639 = vset.pattern.permute.xlu0 0
      %640 = vperm.xlu0 %639, %v59
      %v641 = vpop.permute.xlu0 %640
      %644 = vset.pattern.permute.xlu0 0
      %645 = vperm.xlu0 %644, %v60
      %v646 = vpop.permute.xlu0 %645
      %649 = vset.pattern.permute.xlu0 0
      %650 = vperm.xlu0 %649, %v61
      %v651 = vpop.permute.xlu0 %650
      %654 = vset.pattern.permute.xlu0 0
      %655 = vperm.xlu0 %654, %v62
      %v656 = vpop.permute.xlu0 %655
      %659 = vset.pattern.permute.xlu0 0
      %660 = vperm.xlu0 %659, %v63
      %v661 = vpop.permute.xlu0 %660
      %664 = vset.pattern.permute.xlu0 0
      %665 = vperm.xlu0 %664, %v64
      %v666 = vpop.permute.xlu0 %665
      %vm668 = vcmask 261120
      %v670 = vsel %vm668, %v35, 0
      %v673 = vsel %vm668, %v38, 0
      %v676 = vsel %vm668, %v41, 0
      %v679 = vsel %vm668, %v44, 0
      %v682 = vsel %vm668, %v47, 0
      %v685 = vsel %vm668, %v50, 0
      %v688 = vsel %vm668, %v53, 0
      %v691 = vsel %vm668, %v56, 0
      %693 = vmatprep.subr.mxu0 %v587
      %694 = vmatpush1.msra.mxu0 %v586
      %695 = vmatprep.subr.mxu0 %v585
      %696 = vmatpush1.msra.mxu0 %v584
      %697 = vmatprep.subr.mxu0 %v583
      %698 = vmatpush1.msra.mxu0 %v582
      %699 = vmatprep.subr.mxu0 %v581
      %700 = vmatpush1.msra.mxu0 %v580
      %701 = vmatprep.subr.mxu0 %v579
      %702 = vmatpush1.msra.mxu0 %v578
      %703 = vmatprep.subr.mxu0 %v577
      %704 = vmatpush1.msra.mxu0 %v576
      %705 = vmatprep.subr.mxu0 %v575
      %706 = vmatpush1.msra.mxu0 %v574
      %707 = vmatprep.subr.mxu0 %v573
      %708 = vmatpush1.msra.mxu0 %v572
      %709 = vmatprep.subr.mxu0 %v571
      %710 = vmatpush1.msra.mxu0 %v570
      %711 = vmatprep.subr.mxu0 %v569
      %712 = vmatpush1.msra.mxu0 %v568
      %713 = vmatprep.subr.mxu0 %v567
      %714 = vmatpush1.msra.mxu0 %v566
      %715 = vmatprep.subr.mxu0 %v565
      %716 = vmatpush1.msra.mxu0 %v564
      %717 = vmatprep.subr.mxu0 %v563
      %718 = vmatpush1.msra.mxu0 %v562
      %719 = vmatprep.subr.mxu0 %v561
      %720 = vmatpush1.msra.mxu0 %v560
      %721 = vmatprep.subr.mxu0 %v559
      %722 = vmatpush1.msra.mxu0 %v558
      %723 = vmatprep.subr.mxu0 %v557
      %724 = vmatpush1.msra.mxu0 %v556
      %725 = vmatprep.subr.mxu0 %v619
      %726 = vmatpush2.msra.mxu0 %v618
      %727 = vmatprep.subr.mxu0 %v617
      %728 = vmatpush2.msra.mxu0 %v616
      %729 = vmatprep.subr.mxu0 %v615
      %730 = vmatpush2.msra.mxu0 %v614
      %731 = vmatprep.subr.mxu0 %v613
      %732 = vmatpush2.msra.mxu0 %v612
      %733 = vmatprep.subr.mxu0 %v611
      %734 = vmatpush2.msra.mxu0 %v610
      %735 = vmatprep.subr.mxu0 %v609
      %736 = vmatpush2.msra.mxu0 %v608
      %737 = vmatprep.subr.mxu0 %v607
      %738 = vmatpush2.msra.mxu0 %v606
      %739 = vmatprep.subr.mxu0 %v605
      %740 = vmatpush2.msra.mxu0 %v604
      %741 = vmatprep.subr.mxu0 %v603
      %742 = vmatpush2.msra.mxu0 %v602
      %743 = vmatprep.subr.mxu0 %v601
      %744 = vmatpush2.msra.mxu0 %v600
      %745 = vmatprep.subr.mxu0 %v599
      %746 = vmatpush2.msra.mxu0 %v598
      %747 = vmatprep.subr.mxu0 %v597
      %748 = vmatpush2.msra.mxu0 %v596
      %749 = vmatprep.subr.mxu0 %v595
      %750 = vmatpush2.msra.mxu0 %v594
      %751 = vmatprep.subr.mxu0 %v593
      %752 = vmatpush2.msra.mxu0 %v592
      %753 = vmatprep.subr.mxu0 %v591
      %754 = vmatpush2.msra.mxu0 %v590
      %755 = vmatprep.subr.mxu0 %v589
      %756 = vmatpush2.msra.mxu0 %v588
      %757 = vmatprep.mubr.f32.mxu0 %v34
      %758 = vmatmul.mubr.f32.gmra.mxu0 %v33
      %v759 = vpop.f32.mrf.mxu0
      %v760 = vadd.f32 %v631, %v759
      %v761 = vpop.f32.mrf.mxu0
      %v762 = vadd.f32 %v631, %v761
      %763 = vmatprep.mubr.f32.mxu0 %v37
      %764 = vmatmul.mubr.f32.gmra.mxu0 %v36
      %v765 = vpop.f32.mrf.mxu0
      %v766 = vadd.f32 %v636, %v765
      %v767 = vpop.f32.mrf.mxu0
      %v768 = vadd.f32 %v636, %v767
      %769 = vmatprep.mubr.f32.mxu0 %v40
      %770 = vmatmul.mubr.f32.gmra.mxu0 %v39
      %v771 = vpop.f32.mrf.mxu0
      %v772 = vadd.f32 %v641, %v771
      %v773 = vpop.f32.mrf.mxu0
      %v774 = vadd.f32 %v641, %v773
      %775 = vmatprep.mubr.f32.mxu0 %v43
      %776 = vmatmul.mubr.f32.gmra.mxu0 %v42
      %v777 = vpop.f32.mrf.mxu0
      %v778 = vadd.f32 %v646, %v777
      %v779 = vpop.f32.mrf.mxu0
      %v780 = vadd.f32 %v646, %v779
      %781 = vmatprep.mubr.f32.mxu0 %v46
      %782 = vmatmul.mubr.f32.gmra.mxu0 %v45
      %v783 = vpop.f32.mrf.mxu0
      %v784 = vadd.f32 %v651, %v783
      %v785 = vpop.f32.mrf.mxu0
      %v786 = vadd.f32 %v651, %v785
      %787 = vmatprep.mubr.f32.mxu0 %v49
      %788 = vmatmul.mubr.f32.gmra.mxu0 %v48
      %v789 = vpop.f32.mrf.mxu0
      %v790 = vadd.f32 %v656, %v789
      %v791 = vpop.f32.mrf.mxu0
      %v792 = vadd.f32 %v656, %v791
      %793 = vmatprep.mubr.f32.mxu0 %v52
      %794 = vmatmul.mubr.f32.gmra.mxu0 %v51
      %v795 = vpop.f32.mrf.mxu0
      %v796 = vadd.f32 %v661, %v795
      %v797 = vpop.f32.mrf.mxu0
      %v798 = vadd.f32 %v661, %v797
      %799 = vmatprep.mubr.f32.mxu0 %v55
      %800 = vmatmul.mubr.f32.gmra.mxu0 %v54
      %v801 = vpop.f32.mrf.mxu0
      %v802 = vadd.f32 %v666, %v801
      %v803 = vpop.f32.mrf.mxu0
      %v804 = vadd.f32 %v666, %v803
      %805 = vdwg.mxu0
      %806 = vmatprep.subr.mxu0 0.0
      %807 = vmatpush1.msra.mxu0 0.0
      %808 = vmatprep.subr.mxu0 0.0
      %809 = vmatpush1.msra.mxu0 0.0
      %810 = vmatprep.subr.mxu0 0.0
      %811 = vmatpush1.msra.mxu0 0.0
      %812 = vmatprep.subr.mxu0 0.0
      %813 = vmatpush1.msra.mxu0 0.0
      %814 = vmatprep.subr.mxu0 0.0
      %815 = vmatpush1.msra.mxu0 0.0
      %816 = vmatprep.subr.mxu0 0.0
      %817 = vmatpush1.msra.mxu0 0.0
      %818 = vmatprep.subr.mxu0 0.0
      %819 = vmatpush1.msra.mxu0 0.0
      %820 = vmatprep.subr.mxu0 0.0
      %821 = vmatpush1.msra.mxu0 0.0
      %822 = vmatprep.subr.mxu0 0.0
      %823 = vmatpush1.msra.mxu0 0.0
      %824 = vmatprep.subr.mxu0 0.0
      %825 = vmatpush1.msra.mxu0 0.0
      %826 = vmatprep.subr.mxu0 0.0
      %827 = vmatpush1.msra.mxu0 0.0
      %828 = vmatprep.subr.mxu0 0.0
      %829 = vmatpush1.msra.mxu0 0.0
      %830 = vmatprep.subr.mxu0 %v627
      %831 = vmatpush1.msra.mxu0 %v626
      %832 = vmatprep.subr.mxu0 %v625
      %833 = vmatpush1.msra.mxu0 %v624
      %834 = vmatprep.subr.mxu0 %v623
      %835 = vmatpush1.msra.mxu0 %v622
      %836 = vmatprep.subr.mxu0 %v621
      %837 = vmatpush1.msra.mxu0 %v620
      %838 = vmatprep.subr.mxu0 0.0
      %839 = vmatpush2.msra.mxu0 0.0
      %840 = vmatprep.subr.mxu0 0.0
      %841 = vmatpush2.msra.mxu0 0.0
      %842 = vmatprep.subr.mxu0 0.0
      %843 = vmatpush2.msra.mxu0 0.0
      %844 = vmatprep.subr.mxu0 0.0
      %845 = vmatpush2.msra.mxu0 0.0
      %846 = vmatprep.subr.mxu0 0.0
      %847 = vmatpush2.msra.mxu0 0.0
      %848 = vmatprep.subr.mxu0 0.0
      %849 = vmatpush2.msra.mxu0 0.0
      %850 = vmatprep.subr.mxu0 0.0
      %851 = vmatpush2.msra.mxu0 0.0
      %852 = vmatprep.subr.mxu0 0.0
      %853 = vmatpush2.msra.mxu0 0.0
      %854 = vmatprep.subr.mxu0 0.0
      %855 = vmatpush2.msra.mxu0 0.0
      %856 = vmatprep.subr.mxu0 0.0
      %857 = vmatpush2.msra.mxu0 0.0
      %858 = vmatprep.subr.mxu0 0.0
      %859 = vmatpush2.msra.mxu0 0.0
      %860 = vmatprep.subr.mxu0 0.0
      %861 = vmatpush2.msra.mxu0 0.0
      %862 = vmatprep.subr.mxu0 0.0
      %863 = vmatpush2.msra.mxu0 0.0
      %864 = vmatprep.subr.mxu0 0.0
      %865 = vmatpush2.msra.mxu0 0.0
      %866 = vmatprep.subr.mxu0 0.0
      %867 = vmatpush2.msra.mxu0 0.0
      %868 = vmatprep.subr.mxu0 0.0
      %869 = vmatpush2.msra.mxu0 0.0
      %870 = vmatprep.mubr.f32.mxu0 0.0
      %871 = vmatmul.mubr.f32.gmra.mxu0 %v670
      %v872 = vpop.f32.mrf.mxu0
      %v873 = vadd.f32 %v760, %v872
      %v874 = vpop.f32.mrf.mxu0
      %v875 = vadd.f32 %v762, %v874
      %876 = vmatprep.mubr.f32.mxu0 0.0
      %877 = vmatmul.mubr.f32.gmra.mxu0 %v673
      %v878 = vpop.f32.mrf.mxu0
      %v879 = vadd.f32 %v766, %v878
      %v880 = vpop.f32.mrf.mxu0
      %v881 = vadd.f32 %v768, %v880
      %882 = vmatprep.mubr.f32.mxu0 0.0
      %883 = vmatmul.mubr.f32.gmra.mxu0 %v676
      %v884 = vpop.f32.mrf.mxu0
      %v885 = vadd.f32 %v772, %v884
      %v886 = vpop.f32.mrf.mxu0
      %v887 = vadd.f32 %v774, %v886
      %888 = vmatprep.mubr.f32.mxu0 0.0
      %889 = vmatmul.mubr.f32.gmra.mxu0 %v679
      %v890 = vpop.f32.mrf.mxu0
      %v891 = vadd.f32 %v778, %v890
      %v892 = vpop.f32.mrf.mxu0
      %v893 = vadd.f32 %v780, %v892
      %894 = vmatprep.mubr.f32.mxu0 0.0
      %895 = vmatmul.mubr.f32.gmra.mxu0 %v682
      %v896 = vpop.f32.mrf.mxu0
      %v897 = vadd.f32 %v784, %v896
      %v898 = vpop.f32.mrf.mxu0
      %v899 = vadd.f32 %v786, %v898
      %900 = vmatprep.mubr.f32.mxu0 0.0
      %901 = vmatmul.mubr.f32.gmra.mxu0 %v685
      %v902 = vpop.f32.mrf.mxu0
      %v903 = vadd.f32 %v790, %v902
      %v904 = vpop.f32.mrf.mxu0
      %v905 = vadd.f32 %v792, %v904
      %906 = vmatprep.mubr.f32.mxu0 0.0
      %907 = vmatmul.mubr.f32.gmra.mxu0 %v688
      %v908 = vpop.f32.mrf.mxu0
      %v909 = vadd.f32 %v796, %v908
      %v910 = vpop.f32.mrf.mxu0
      %v911 = vadd.f32 %v798, %v910
      %912 = vmatprep.mubr.f32.mxu0 0.0
      %913 = vmatmul.mubr.f32.gmra.mxu0 %v691
      %v914 = vpop.f32.mrf.mxu0
      %v915 = vadd.f32 %v802, %v914
      %v916 = vpop.f32.mrf.mxu0
      %v917 = vadd.f32 %v804, %v916
      %918 = vdwg.mxu0
      %vm919 = vcmp.gt.f32.partialorder %v873, 0.0
      %vm920 = vcmp.gt.f32.partialorder %v875, 0.0
      %vm921 = vcmp.gt.f32.partialorder %v879, 0.0
      %vm922 = vcmp.gt.f32.partialorder %v881, 0.0
      %vm923 = vcmp.gt.f32.partialorder %v885, 0.0
      %vm924 = vcmp.gt.f32.partialorder %v887, 0.0
      %vm925 = vcmp.gt.f32.partialorder %v891, 0.0
      %vm926 = vcmp.gt.f32.partialorder %v893, 0.0
      %vm927 = vcmp.gt.f32.partialorder %v897, 0.0
      %vm928 = vcmp.gt.f32.partialorder %v899, 0.0
      %vm929 = vcmp.gt.f32.partialorder %v903, 0.0
      %vm930 = vcmp.gt.f32.partialorder %v905, 0.0
      %vm931 = vcmp.gt.f32.partialorder %v909, 0.0
      %vm932 = vcmp.gt.f32.partialorder %v911, 0.0
      %vm933 = vcmp.gt.f32.partialorder %v915, 0.0
      %vm934 = vcmp.gt.f32.partialorder %v917, 0.0
      %936 = vset.pattern.permute.xlu0 0
      %937 = vperm.xlu0 %936, %v65
      %v938 = vpop.permute.xlu0 %937
      %941 = vset.pattern.permute.xlu0 0
      %942 = vperm.xlu0 %941, %v66
      %v943 = vpop.permute.xlu0 %942
      %946 = vset.pattern.permute.xlu0 0
      %947 = vperm.xlu0 %946, %v67
      %v948 = vpop.permute.xlu0 %947
      %951 = vset.pattern.permute.xlu0 0
      %952 = vperm.xlu0 %951, %v68
      %v953 = vpop.permute.xlu0 %952
      %956 = vset.pattern.permute.xlu0 0
      %957 = vperm.xlu0 %956, %v69
      %v958 = vpop.permute.xlu0 %957
      %961 = vset.pattern.permute.xlu0 0
      %962 = vperm.xlu0 %961, %v70
      %v963 = vpop.permute.xlu0 %962
      %966 = vset.pattern.permute.xlu0 0
      %967 = vperm.xlu0 %966, %v71
      %v968 = vpop.permute.xlu0 %967
      %971 = vset.pattern.permute.xlu0 0
      %972 = vperm.xlu0 %971, %v72
      %v973 = vpop.permute.xlu0 %972
      %v975 = vmul.f32 %v938, %v873
      %v976 = vmul.f32 %v938, %v875
      %v977 = vmul.f32 %v943, %v879
      %v978 = vmul.f32 %v943, %v881
      %v979 = vmul.f32 %v948, %v885
      %v980 = vmul.f32 %v948, %v887
      %v981 = vmul.f32 %v953, %v891
      %v982 = vmul.f32 %v953, %v893
      %v983 = vmul.f32 %v958, %v897
      %v984 = vmul.f32 %v958, %v899
      %v985 = vmul.f32 %v963, %v903
      %v986 = vmul.f32 %v963, %v905
      %v987 = vmul.f32 %v968, %v909
      %v988 = vmul.f32 %v968, %v911
      %v989 = vmul.f32 %v973, %v915
      %v990 = vmul.f32 %v973, %v917
      %v991 = vsel %vm919, %v873, %v975
      %v992 = vsel %vm920, %v875, %v976
      %v993 = vsel %vm921, %v879, %v977
      %v994 = vsel %vm922, %v881, %v978
      %v995 = vsel %vm923, %v885, %v979
      %v996 = vsel %vm924, %v887, %v980
      %v997 = vsel %vm925, %v891, %v981
      %v998 = vsel %vm926, %v893, %v982
      %v999 = vsel %vm927, %v897, %v983
      %v1000 = vsel %vm928, %v899, %v984
      %v1001 = vsel %vm929, %v903, %v985
      %v1002 = vsel %vm930, %v905, %v986
      %v1003 = vsel %vm931, %v909, %v987
      %v1004 = vsel %vm932, %v911, %v988
      %v1005 = vsel %vm933, %v915, %v989
      %v1006 = vsel %vm934, %v917, %v990
      %v1007 = vadd.f32 %v991, %v992
      %1008 = vadd.xlane.f32.xlu0 %v1007
      %v1009 = vpop.xlane.xlu0 %1008
      %v1010 = vadd.f32 %v993, %v994
      %1011 = vadd.xlane.f32.xlu0 %v1010
      %v1012 = vpop.xlane.xlu0 %1011
      %v1013 = vadd.f32 %v995, %v996
      %1014 = vadd.xlane.f32.xlu0 %v1013
      %v1015 = vpop.xlane.xlu0 %1014
      %v1016 = vadd.f32 %v997, %v998
      %1017 = vadd.xlane.f32.xlu0 %v1016
      %v1018 = vpop.xlane.xlu0 %1017
      %v1019 = vadd.f32 %v999, %v1000
      %1020 = vadd.xlane.f32.xlu0 %v1019
      %v1021 = vpop.xlane.xlu0 %1020
      %v1022 = vadd.f32 %v1001, %v1002
      %1023 = vadd.xlane.f32.xlu0 %v1022
      %v1024 = vpop.xlane.xlu0 %1023
      %v1025 = vadd.f32 %v1003, %v1004
      %1026 = vadd.xlane.f32.xlu0 %v1025
      %v1027 = vpop.xlane.xlu0 %1026
      %v1028 = vadd.f32 %v1005, %v1006
      %1029 = vadd.xlane.f32.xlu0 %v1028
      %v1030 = vpop.xlane.xlu0 %1029
      %v1031 = vmul.f32 %v1009, 0.00390625
      %v1032 = vmul.f32 %v1012, 0.00390625
      %v1033 = vmul.f32 %v1015, 0.00390625
      %v1034 = vmul.f32 %v1018, 0.00390625
      %v1035 = vmul.f32 %v1021, 0.00390625
      %v1036 = vmul.f32 %v1024, 0.00390625
      %v1037 = vmul.f32 %v1027, 0.00390625
      %v1038 = vmul.f32 %v1030, 0.00390625
      %v1039 = vmul.f32 %v73, %v1031
      %v1040 = vmul.f32 %v74, %v1032
      %v1041 = vmul.f32 %v75, %v1033
      %v1042 = vmul.f32 %v76, %v1034
      %v1043 = vmul.f32 %v77, %v1035
      %v1044 = vmul.f32 %v78, %v1036
      %v1045 = vmul.f32 %v79, %v1037
      %v1046 = vmul.f32 %v80, %v1038
      %vm1047 = vcmask 64512
      %v1048 = vsel %vm1047, %v1039, 0.0
      %v1049 = vsel %vm1047, %v1040, 0.0
      %v1050 = vadd.f32 %v1048, %v1049
      %v1051 = vsel %vm1047, %v1041, 0.0
      %v1052 = vadd.f32 %v1050, %v1051
      %v1053 = vsel %vm1047, %v1042, 0.0
      %v1054 = vadd.f32 %v1052, %v1053
      %v1055 = vsel %vm1047, %v1043, 0.0
      %v1056 = vadd.f32 %v1054, %v1055
      %v1057 = vsel %vm1047, %v1044, 0.0
      %v1058 = vadd.f32 %v1056, %v1057
      %v1059 = vsel %vm1047, %v1045, 0.0
      %v1060 = vadd.f32 %v1058, %v1059
      %v1061 = vsel %vm1047, %v1046, 0.0
      %v1062 = vadd.f32 %v1060, %v1061
      %v1063 = vrot.slane %v1062, 4
      %v1064 = vadd.f32 %v1062, %v1063
      %v1065 = vrot.slane %v1064, 2
      %v1066 = vadd.f32 %v1064, %v1065
      %v1067 = vrot.slane %v1066, 1
      %v1068 = vadd.f32 %v1066, %v1067
      %v1069 = vadd.f32 %v1068, %v81
      %v1070 = vmax.f32 %v1069, 0.0
      %v1071 = vlaneseq
      %v1072 = vshrl.u32 %v1071, 7
      %v1073 = vsub.s32 0, %v1072
      %v1074 = vrot.slane %v1070, %v1073
      %v1075 = vmul.f32 %v82, %v1074
      %v1076 = vmul.f32 %v83, %v1074
      %v1077 = vmul.f32 %v84, %v1074
      %v1078 = vmul.f32 %v85, %v1074
      %v1079 = vmul.f32 %v86, %v1074
      %v1080 = vmul.f32 %v87, %v1074
      %v1081 = vmul.f32 %v88, %v1074
      %v1082 = vmul.f32 %v89, %v1074
      %v1083 = vsel %vm1047, %v1075, 0.0
      %1084 = vadd.xlane.f32.xlu0 %v1083
      %v1085 = vpop.xlane.xlu0 %1084
      %v1086 = vsel %vm1047, %v1076, 0.0
      %1087 = vadd.xlane.f32.xlu0 %v1086
      %v1088 = vpop.xlane.xlu0 %1087
      %v1089 = vsel %vm1047, %v1077, 0.0
      %1090 = vadd.xlane.f32.xlu0 %v1089
      %v1091 = vpop.xlane.xlu0 %1090
      %v1092 = vsel %vm1047, %v1078, 0.0
      %1093 = vadd.xlane.f32.xlu0 %v1092
      %v1094 = vpop.xlane.xlu0 %1093
      %v1095 = vsel %vm1047, %v1079, 0.0
      %1096 = vadd.xlane.f32.xlu0 %v1095
      %v1097 = vpop.xlane.xlu0 %1096
      %v1098 = vsel %vm1047, %v1080, 0.0
      %1099 = vadd.xlane.f32.xlu0 %v1098
      %v1100 = vpop.xlane.xlu0 %1099
      %v1101 = vsel %vm1047, %v1081, 0.0
      %1102 = vadd.xlane.f32.xlu0 %v1101
      %v1103 = vpop.xlane.xlu0 %1102
      %v1104 = vsel %vm1047, %v1082, 0.0
      %1105 = vadd.xlane.f32.xlu0 %v1104
      %v1106 = vpop.xlane.xlu0 %1105
      %v1107 = vadd.f32 %v1085, %v90
      %v1108 = vadd.f32 %v1088, %v91
      %v1109 = vadd.f32 %v1091, %v92
      %v1110 = vadd.f32 %v1094, %v93
      %v1111 = vadd.f32 %v1097, %v94
      %v1112 = vadd.f32 %v1100, %v95
      %v1113 = vadd.f32 %v1103, %v96
      %v1114 = vadd.f32 %v1106, %v97
      %v1115 = vsub.f32 0.0, %v1107
      %v1116 = vsub.f32 0.0, %v1108
      %v1117 = vsub.f32 0.0, %v1109
      %v1118 = vsub.f32 0.0, %v1110
      %v1119 = vsub.f32 0.0, %v1111
      %v1120 = vsub.f32 0.0, %v1112
      %v1121 = vsub.f32 0.0, %v1113
      %v1122 = vsub.f32 0.0, %v1114
      %v1123 = vmul.f32 %v1115, 1.442695
      %v1124 = vpow.pop %v1123
      %v1125 = vmul.f32 %v1116, 1.442695
      %v1126 = vpow.pop %v1125
      %v1127 = vmul.f32 %v1117, 1.442695
      %v1128 = vpow.pop %v1127
      %v1129 = vmul.f32 %v1118, 1.442695
      %v1130 = vpow.pop %v1129
      %v1131 = vmul.f32 %v1119, 1.442695
      %v1132 = vpow.pop %v1131
      %v1133 = vmul.f32 %v1120, 1.442695
      %v1134 = vpow.pop %v1133
      %v1135 = vmul.f32 %v1121, 1.442695
      %v1136 = vpow.pop %v1135
      %v1137 = vmul.f32 %v1122, 1.442695
      %v1138 = vpow.pop %v1137
      %v1139 = vadd.f32 %v1124, 1.0
      %v1140 = vadd.f32 %v1126, 1.0
      %v1141 = vadd.f32 %v1128, 1.0
      %v1142 = vadd.f32 %v1130, 1.0
      %v1143 = vadd.f32 %v1132, 1.0
      %v1144 = vadd.f32 %v1134, 1.0
      %v1145 = vadd.f32 %v1136, 1.0
      %v1146 = vadd.f32 %v1138, 1.0
      %v1147 = vrcp.pop %v1139
      %v1148 = vmul.f32 1.0, %v1147
      %v1149 = vrcp.pop %v1140
      %v1150 = vmul.f32 1.0, %v1149
      %v1151 = vrcp.pop %v1141
      %v1152 = vmul.f32 1.0, %v1151
      %v1153 = vrcp.pop %v1142
      %v1154 = vmul.f32 1.0, %v1153
      %v1155 = vrcp.pop %v1143
      %v1156 = vmul.f32 1.0, %v1155
      %v1157 = vrcp.pop %v1144
      %v1158 = vmul.f32 1.0, %v1157
      %v1159 = vrcp.pop %v1145
      %v1160 = vmul.f32 1.0, %v1159
      %v1161 = vrcp.pop %v1146
      %v1162 = vmul.f32 1.0, %v1161
      %1164 = vset.pattern.permute.xlu0 0
      %1165 = vperm.xlu0 %1164, %v1148
      %v1166 = vpop.permute.xlu0 %1165
      %1169 = vset.pattern.permute.xlu0 0
      %1170 = vperm.xlu0 %1169, %v1150
      %v1171 = vpop.permute.xlu0 %1170
      %1174 = vset.pattern.permute.xlu0 0
      %1175 = vperm.xlu0 %1174, %v1152
      %v1176 = vpop.permute.xlu0 %1175
      %1179 = vset.pattern.permute.xlu0 0
      %1180 = vperm.xlu0 %1179, %v1154
      %v1181 = vpop.permute.xlu0 %1180
      %1184 = vset.pattern.permute.xlu0 0
      %1185 = vperm.xlu0 %1184, %v1156
      %v1186 = vpop.permute.xlu0 %1185
      %1189 = vset.pattern.permute.xlu0 0
      %1190 = vperm.xlu0 %1189, %v1158
      %v1191 = vpop.permute.xlu0 %1190
      %1194 = vset.pattern.permute.xlu0 0
      %1195 = vperm.xlu0 %1194, %v1160
      %v1196 = vpop.permute.xlu0 %1195
      %1199 = vset.pattern.permute.xlu0 0
      %1200 = vperm.xlu0 %1199, %v1162
      %v1201 = vpop.permute.xlu0 %1200
      %v1203 = vmul.f32 %v991, %v1166
      %v1204 = vmul.f32 %v992, %v1166
      %v1205 = vmul.f32 %v993, %v1171
      %v1206 = vmul.f32 %v994, %v1171
      %v1207 = vmul.f32 %v995, %v1176
      %v1208 = vmul.f32 %v996, %v1176
      %v1209 = vmul.f32 %v997, %v1181
      %v1210 = vmul.f32 %v998, %v1181
      %v1211 = vmul.f32 %v999, %v1186
      %v1212 = vmul.f32 %v1000, %v1186
      %v1213 = vmul.f32 %v1001, %v1191
      %v1214 = vmul.f32 %v1002, %v1191
      %v1215 = vmul.f32 %v1003, %v1196
      %v1216 = vmul.f32 %v1004, %v1196
      %v1217 = vmul.f32 %v1005, %v1201
      %v1218 = vmul.f32 %v1006, %v1201
      %s1219 = smul.u32 %s99, 16
      %s1220 = smul.addr %s1219, 8
      %s1221 = scalar_lea.vmem [#allocation3], %s1220
      %1222 = vst [vmem:[%s1221] sm:$0xff] %v1203
      %1223 = vst [vmem:[%s1221 + $0x8] sm:$0xff] %v1204
      %1224 = vst [vmem:[%s1221 + $0x10] sm:$0xff] %v1205
      %1225 = vst [vmem:[%s1221 + $0x18] sm:$0xff] %v1206
      %1226 = vst [vmem:[%s1221 + $0x20] sm:$0xff] %v1207
      %1227 = vst [vmem:[%s1221 + $0x28] sm:$0xff] %v1208
      %1228 = vst [vmem:[%s1221 + $0x30] sm:$0xff] %v1209
      %1229 = vst [vmem:[%s1221 + $0x38] sm:$0xff] %v1210
      %1230 = vst [vmem:[%s1221 + $0x40] sm:$0xff] %v1211
      %1231 = vst [vmem:[%s1221 + $0x48] sm:$0xff] %v1212
      %1232 = vst [vmem:[%s1221 + $0x50] sm:$0xff] %v1213
      %1233 = vst [vmem:[%s1221 + $0x58] sm:$0xff] %v1214
      %1234 = vst [vmem:[%s1221 + $0x60] sm:$0xff] %v1215
      %1235 = vst [vmem:[%s1221 + $0x68] sm:$0xff] %v1216
      %1236 = vst [vmem:[%s1221 + $0x70] sm:$0xff] %v1217
      %1237 = vst [vmem:[%s1221 + $0x78] sm:$0xff] %v1218
    $region42: #{tpu_custom_call.1} parent=1 // loop_footer
      %s103 = sadd.s32 1, %s99
    $region43: #{tpu_custom_call.1} parent=1 // loop_footer_branch
      %98 = sbr.rel target = $region39
    $region44: #{tpu_custom_call.1} parent=1 // loop_exit
      _
    // Predicated region
    $region45: #{tpu_custom_call.1} parent=1 // pred_check
      _
    $region46: #{tpu_custom_call.1} parent=1 // pred_check_branch
      %1239 = sbr.rel (0) target = $region48
    $region47: #{tpu_custom_call.1} parent=1 // pred_region
      %s1241 = ssub.s32 4096, 4096
      %1242 = vsyncadd [#allocation4], %s1241
      %s1243 = sshll.u32 [#allocation3], 4
      %s1244 = int_to_ptr.vmem [resolvable:$true] %s1243
      %1249 = dma.vmem_to_hbm [thread:$0]  %s1244, 4096, %s9, [#allocation4], 256, 256, 16
    $region48: #{tpu_custom_call.1} parent=1 // pred_fallthru
      _
    // Predicated region
    $region49: #{tpu_custom_call.1} parent=1 // pred_check
      _
    $region50: #{tpu_custom_call.1} parent=1 // pred_check_branch
      %1251 = sbr.rel (0) target = $region52
    $region51: #{tpu_custom_call.1} parent=1 // pred_region
      %1252 = dma.done [#allocation4], 4096
    $region52: #{tpu_custom_call.1} parent=1 // pred_fallthru
      _
    %1253 = vsyncpa [#allocation4], 1

</llo_original>
